<compile_context>
chip_gen: v7x
topology: tpu7x:2x2x1
jax: 0.10.0
libtpu: 0.0.40
codegen_flags: <defaults>
</compile_context>

<pallas_src>
import functools

import jax
import jax.numpy as jnp
from jax.experimental import pallas as pl
from jax.experimental.pallas import tpu as pltpu

LANE = 128


def _round_up(n, m):
    return ((n + m - 1) // m) * m


def _cvae_kernel(
    slab_ref,     # (TB, label+latent+input)  = [y | eps | x]
    w1_ref,       # (label+latent+input, hidden)  eps rows zeroed, resident
    b1_ref,       # (1, hidden)                   resident
    w2_ref,       # (hidden, mulv_pad)   fused fc21|fc22, lane-padded, resident
    b2_ref,       # (1, mulv_pad)                 resident
    w3z_ref,      # (latent, hidden)   fc3 rows for z, resident
    w3y_ref,      # (label, hidden)    fc3 rows for y, resident
    b3_ref,       # (1, hidden)                   resident
    w4_ref,       # (hidden, recon_pad)  fc4, lane-padded, resident
    b4_ref,       # (1, recon_pad)                resident
    recon_ref,    # out: (TB, recon_pad)   [recon | 0...]
    mulv_ref,     # out: (TB, mulv_pad)    [mu | logvar | 0...]
    *,
    label_dim,
    latent_dim,
):
    f32 = jnp.float32
    slab = slab_ref[...]
    y = slab[:, :label_dim]                              # lane offset 0 -> free view
    eps = slab[:, label_dim:label_dim + latent_dim]

    # ---- encode ----
    h1 = jnp.dot(slab, w1_ref[...], preferred_element_type=f32) + b1_ref[...]
    h1 = jnp.maximum(h1, 0.0)  # ReLU

    # fused fc21|fc22: one MXU pass, 128-lane dense output slab
    mulv = jnp.dot(h1, w2_ref[...], preferred_element_type=f32) + b2_ref[...]
    mu = mulv[:, :latent_dim]
    logvar = mulv[:, latent_dim:2 * latent_dim]

    # ---- reparameterize ----
    std = jnp.exp(0.5 * logvar)
    z = mu + eps * std

    # ---- decode ----
    # cat([z, y]) @ W3 == z @ W3[:latent] + y @ W3[latent:]
    h3 = (jnp.dot(z, w3z_ref[...], preferred_element_type=f32)
          + jnp.dot(y, w3y_ref[...], preferred_element_type=f32)
          + b3_ref[...])
    h3 = jnp.maximum(h3, 0.0)  # ReLU

    recon = jnp.dot(h3, w4_ref[...], preferred_element_type=f32) + b4_ref[...]

    recon_ref[...] = recon.astype(recon_ref.dtype)
    mulv_ref[...] = mulv.astype(mulv_ref.dtype)


def _tpu_vmem_and_cores():
    """Best-effort query of per-core VMEM capacity and TensorCore count."""
    vmem_cap = 64 << 20   # conservative default (v7x per-TC)
    num_cores = 1
    try:
        info = pltpu.get_tpu_info()
        cap = getattr(info, "vmem_capacity_bytes", None)
        if cap:
            vmem_cap = int(cap)
        for attr in ("num_cores", "core_count", "num_tensorcores",
                     "tensorcores_per_chip"):
            v = getattr(info, attr, None)
            if isinstance(v, int) and v > 0:
                num_cores = v
                break
    except Exception:
        pass
    return vmem_cap, num_cores


def _pick_batch_tile(B, num_cores, max_tile=2048):
    """Per-grid-step overhead dominates at these narrow feature widths, so use the
    fewest tiles possible: one per TensorCore (keeps both v7x TCs busy via
    dimension_semantics=("parallel",)), capped so huge batches keep a sane
    per-step VMEM footprint."""
    n_tiles = max(1, int(num_cores))
    tb = -(-B // n_tiles)                 # ceil(B / n_tiles)
    tb = _round_up(max(tb, 8), 8)
    return min(tb, max_tile)


def cvae_forward(x, y, eps, params, *, batch_tile=None):
    """Runs the CVAE forward pass. Returns (recon_x, mu, logvar)."""
    B, input_dim = x.shape
    _, label_dim = y.shape
    latent_dim = eps.shape[1]
    dtype = x.dtype

    w1, b1 = params["fc1"]
    w21, b21 = params["fc21"]
    w22, b22 = params["fc22"]
    w3, b3 = params["fc3"]
    w4, b4 = params["fc4"]
    hidden_dim = w1.shape[1]

    mulv_pad = _round_up(2 * latent_dim, LANE)
    recon_pad = _round_up(input_dim, LANE)
    slab_w = label_dim + latent_dim + input_dim

    # fc1 weight permuted to the [y | eps | x] slab order; eps rows are zero so the
    # whole slab goes through the MXU unchanged (K < 128 -> one pass either way).
    w1p = jnp.concatenate(
        [w1[input_dim:, :],
         jnp.zeros((latent_dim, hidden_dim), w1.dtype),
         w1[:input_dim, :]], axis=0)
    b1p = b1

    # fc21 | fc22 fused along the output axis and zero-padded to a 128-lane slab
    # (unmasked full-width stores + dense HBM writeback).
    w2p = jnp.concatenate(
        [w21, w22, jnp.zeros((hidden_dim, mulv_pad - 2 * latent_dim), w21.dtype)],
        axis=1)
    b2p = jnp.concatenate(
        [b21, b22, jnp.zeros((1, mulv_pad - 2 * latent_dim), b21.dtype)], axis=1)

    # fc3 split into z-rows / y-rows (avoids an in-kernel lane concat).
    w3z = w3[:latent_dim, :]
    w3y = w3[latent_dim:, :]

    # fc4 zero-padded to a 128-lane output slab.
    w4p = jnp.concatenate(
        [w4, jnp.zeros((hidden_dim, recon_pad - input_dim), w4.dtype)], axis=1)
    b4p = jnp.concatenate(
        [b4, jnp.zeros((1, recon_pad - input_dim), b4.dtype)], axis=1)

    # Single batch-tiled input stream: [y | eps | x] (one DMA stream per grid step).
    slab = jnp.concatenate([y, eps, x], axis=1)

    vmem_cap, num_cores = _tpu_vmem_and_cores()
    TB = batch_tile if batch_tile is not None else _pick_batch_tile(B, num_cores)
    TB = max(8, _round_up(int(TB), 8))

    itemsize = jnp.dtype(dtype).itemsize
    weight_bytes = sum(int(a.size) * a.dtype.itemsize
                       for a in (w1p, b1p, w2p, b2p, w3z, w3y, b3, w4p, b4p))
    vmem_budget_cap = max(vmem_cap - (8 << 20), 16 << 20)   # leave Mosaic headroom

    def vmem_need(tb, weight_bufs):
        tile_io = tb * (slab_w + recon_pad + mulv_pad) * itemsize
        scratch = tb * (2 * hidden_dim + mulv_pad + recon_pad + 2 * latent_dim) * 4
        return weight_bufs * weight_bytes + 2 * tile_io + scratch + (2 << 20)

    # Shrink TB if (conservatively, assuming double-buffered weights) the plan
    # would not fit the per-core VMEM budget.
    while vmem_need(TB, 2) > vmem_budget_cap and TB > 8:
        TB = max(8, _round_up(TB // 2, 8))

    Bp = _round_up(B, TB)
    if Bp != B:
        slab = jnp.pad(slab, ((0, Bp - B), (0, 0)))
    grid = (Bp // TB,)

    def batch_spec(width):
        return pl.BlockSpec((TB, width), lambda i: (i, 0))

    kernel = functools.partial(_cvae_kernel, label_dim=label_dim,
                               latent_dim=latent_dim)

    def _call(single_buffer_weights):
        if single_buffer_weights:
            def resident_spec(arr):
                # Constant index_map -> fetched once; Buffered(1) drops the second
                # (never-used) weight buffer, halving resident-weight VMEM.
                return pl.BlockSpec(arr.shape, lambda i: (0, 0),
                                    pipeline_mode=pl.Buffered(1))
            weight_bufs = 1
        else:
            def resident_spec(arr):
                return pl.BlockSpec(arr.shape, lambda i: (0, 0))
            weight_bufs = 2

        in_specs = [
            batch_spec(slab_w),                                   # [y | eps | x]
            resident_spec(w1p), resident_spec(b1p),
            resident_spec(w2p), resident_spec(b2p),
            resident_spec(w3z), resident_spec(w3y), resident_spec(b3),
            resident_spec(w4p), resident_spec(b4p),
        ]
        out_specs = (
            batch_spec(recon_pad),                                # [recon | 0]
            batch_spec(mulv_pad),                                 # [mu | logvar | 0]
        )
        out_shape = (
            jax.ShapeDtypeStruct((Bp, recon_pad), dtype),
            jax.ShapeDtypeStruct((Bp, mulv_pad), dtype),
        )
        vmem_limit = int(min(max(vmem_need(TB, weight_bufs), 32 << 20),
                             vmem_budget_cap))

        return pl.pallas_call(
            kernel,
            out_shape=out_shape,
            grid=grid,
            in_specs=in_specs,
            out_specs=out_specs,
            compiler_params=pltpu.CompilerParams(
                dimension_semantics=("parallel",),   # shard batch tiles across TCs
                vmem_limit_bytes=vmem_limit,
            ),
        )(slab, w1p, b1p, w2p, b2p, w3z, w3y, b3, w4p, b4p)

    try:
        recon_slab, mulv_slab = _call(True)
    except Exception:
        # Fallback if this Mosaic build rejects single-buffered (Buffered(1)) specs.
        recon_slab, mulv_slab = _call(False)

    recon = recon_slab[:B, :input_dim]
    mu = mulv_slab[:B, :latent_dim]
    logvar = mulv_slab[:B, latent_dim:2 * latent_dim]
    return recon, mu, logvar


def init_params(key, input_dim, label_dim, latent_dim, hidden_dim, dtype=jnp.float32):
    """PyTorch-Linear-style init: U(-1/sqrt(fan_in), 1/sqrt(fan_in)).
    Weights stored as (in_features, out_features)."""
    def linear(k, fan_in, fan_out):
        kw, kb = jax.random.split(k)
        bound = 1.0 / jnp.sqrt(jnp.asarray(fan_in, dtype))
        w = jax.random.uniform(kw, (fan_in, fan_out), dtype, -bound, bound)
        b = jax.random.uniform(kb, (1, fan_out), dtype, -bound, bound)
        return w, b

    keys = jax.random.split(key, 5)
    return {
        "fc1": linear(keys[0], input_dim + label_dim, hidden_dim),
        "fc21": linear(keys[1], hidden_dim, latent_dim),
        "fc22": linear(keys[2], hidden_dim, latent_dim),
        "fc3": linear(keys[3], latent_dim + label_dim, hidden_dim),
        "fc4": linear(keys[4], hidden_dim, input_dim),
    }


def _reference_forward(x, y, eps, params):
    """Pure-JAX reference for correctness checking."""
    xy = jnp.concatenate([x, y], axis=1)
    w1, b1 = params["fc1"]
    w21, b21 = params["fc21"]
    w22, b22 = params["fc22"]
    w3, b3 = params["fc3"]
    w4, b4 = params["fc4"]
    h1 = jnp.maximum(xy @ w1 + b1, 0.0)
    mu = h1 @ w21 + b21
    logvar = h1 @ w22 + b22
    z = mu + eps * jnp.exp(0.5 * logvar)
    h3 = jnp.maximum(jnp.concatenate([z, y], axis=1) @ w3 + b3, 0.0)
    return h3 @ w4 + b4, mu, logvar


if __name__ == "__main__":
    input_dim = 16
    label_dim = 4
    latent_dim = 10
    hidden_dim = 64

    key = jax.random.PRNGKey(0)
    kp, kdata = jax.random.split(key)
    params = init_params(kp, input_dim, label_dim, latent_dim, hidden_dim)

    ok = True
    # Cases: tiny single-tile batch; auto-tiled batch (single big tile, or split
    # across 2 TCs if detected); forced multi-step grid exercising the padding path.
    for batch, tile in ((8, None), (300, None), (300, 128)):
        kx, ky, keps, kdata = jax.random.split(kdata, 4)
        x = jax.random.normal(kx, (batch, input_dim), jnp.float32)
        yl = jax.random.normal(ky, (batch, label_dim), jnp.float32)
        # torch.randn_like(std): the random draw is supplied explicitly for determinism.
        eps = jax.random.normal(keps, (batch, latent_dim), jnp.float32)

        recon, mu, logvar = cvae_forward(x, yl, eps, params, batch_tile=tile)
        jax.block_until_ready((recon, mu, logvar))

        r_ref, mu_ref, lv_ref = _reference_forward(x, yl, eps, params)
        ok &= recon.shape == (batch, input_dim)
        ok &= mu.shape == (batch, latent_dim)
        ok &= logvar.shape == (batch, latent_dim)
        ok &= bool(jnp.allclose(recon, r_ref, atol=1e-4, rtol=1e-4))
        ok &= bool(jnp.allclose(mu, mu_ref, atol=1e-4, rtol=1e-4))
        ok &= bool(jnp.allclose(logvar, lv_ref, atol=1e-4, rtol=1e-4))

    assert ok
    print("KERNEL_OK")
</pallas_src>

<mosaic_0001>
module attributes {stable_mosaic.version = 11 : i64} {
  func.func @_cvae_kernel(%arg0: i32, %arg1: memref<8x30xf32, #tpu.memory_space<vmem>>, %arg2: memref<30x64xf32, #tpu.memory_space<vmem>>, %arg3: memref<1x64xf32, #tpu.memory_space<vmem>>, %arg4: memref<64x128xf32, #tpu.memory_space<vmem>>, %arg5: memref<1x128xf32, #tpu.memory_space<vmem>>, %arg6: memref<10x64xf32, #tpu.memory_space<vmem>>, %arg7: memref<4x64xf32, #tpu.memory_space<vmem>>, %arg8: memref<1x64xf32, #tpu.memory_space<vmem>>, %arg9: memref<64x128xf32, #tpu.memory_space<vmem>>, %arg10: memref<1x128xf32, #tpu.memory_space<vmem>>, %arg11: memref<8x128xf32, #tpu.memory_space<vmem>>, %arg12: memref<8x128xf32, #tpu.memory_space<vmem>>) attributes {dimension_semantics = [#tpu.dimension_semantics<parallel>], iteration_bounds = array<i64: 1>, scalar_prefetch = 0 : i64, scratch_operands = 0 : i64, tpu.core_type = #tpu.core_type<tc>, window_params = [{transform_indices = @transform_0, window_bounds = array<i64: 8, 30>}, {pipeline_mode = #tpu.pipeline_mode<synchronous>, transform_indices = @transform_1, window_bounds = array<i64: 30, 64>}, {pipeline_mode = #tpu.pipeline_mode<synchronous>, transform_indices = @transform_2, window_bounds = array<i64: 1, 64>}, {pipeline_mode = #tpu.pipeline_mode<synchronous>, transform_indices = @transform_3, window_bounds = array<i64: 64, 128>}, {pipeline_mode = #tpu.pipeline_mode<synchronous>, transform_indices = @transform_4, window_bounds = array<i64: 1, 128>}, {pipeline_mode = #tpu.pipeline_mode<synchronous>, transform_indices = @transform_5, window_bounds = array<i64: 10, 64>}, {pipeline_mode = #tpu.pipeline_mode<synchronous>, transform_indices = @transform_6, window_bounds = array<i64: 4, 64>}, {pipeline_mode = #tpu.pipeline_mode<synchronous>, transform_indices = @transform_7, window_bounds = array<i64: 1, 64>}, {pipeline_mode = #tpu.pipeline_mode<synchronous>, transform_indices = @transform_8, window_bounds = array<i64: 64, 128>}, {pipeline_mode = #tpu.pipeline_mode<synchronous>, transform_indices = @transform_9, window_bounds = array<i64: 1, 128>}, {transform_indices = @transform_10, window_bounds = array<i64: 8, 128>}, {transform_indices = @transform_11, window_bounds = array<i64: 8, 128>}]} {
    %c0 = arith.constant 0 : index
    %c0_0 = arith.constant 0 : index
    %0 = vector.load %arg1[%c0, %c0_0] : memref<8x30xf32, #tpu.memory_space<vmem>>, vector<8x30xf32>
    %1 = vector.extract_strided_slice %0 {offsets = [0, 0], sizes = [8, 4], strides = [1, 1]} : vector<8x30xf32> to vector<8x4xf32>
    %2 = vector.extract_strided_slice %0 {offsets = [0, 4], sizes = [8, 10], strides = [1, 1]} : vector<8x30xf32> to vector<8x10xf32>
    %c0_1 = arith.constant 0 : index
    %c0_2 = arith.constant 0 : index
    %3 = vector.load %arg2[%c0_1, %c0_2] : memref<30x64xf32, #tpu.memory_space<vmem>>, vector<30x64xf32>
    %cst = arith.constant dense<0.000000e+00> : vector<8x64xf32>
    %4 = tpu.matmul %0, %3, %cst {dimension_numbers = #tpu.dot_dimension_numbers<[1], [0], [0], [1], [0, 0, 1, 1], [], []>} : vector<8x30xf32>, vector<30x64xf32>, vector<8x64xf32> -> vector<8x64xf32>
    %c0_3 = arith.constant 0 : index
    %c0_4 = arith.constant 0 : index
    %5 = vector.load %arg3[%c0_3, %c0_4] : memref<1x64xf32, #tpu.memory_space<vmem>>, vector<1x64xf32>
    %6 = vector.broadcast %5 : vector<1x64xf32> to vector<8x64xf32>
    %7 = arith.addf %4, %6 : vector<8x64xf32>
    %cst_5 = arith.constant 0.000000e+00 : f32
    %8 = vector.broadcast %cst_5 : f32 to vector<8x64xf32>
    %9 = arith.maximumf %7, %8 : vector<8x64xf32>
    %c0_6 = arith.constant 0 : index
    %c0_7 = arith.constant 0 : index
    %10 = vector.load %arg4[%c0_6, %c0_7] : memref<64x128xf32, #tpu.memory_space<vmem>>, vector<64x128xf32>
    %cst_8 = arith.constant dense<0.000000e+00> : vector<8x128xf32>
    %11 = tpu.matmul %9, %10, %cst_8 {dimension_numbers = #tpu.dot_dimension_numbers<[1], [0], [0], [1], [0, 0, 1, 1], [], []>} : vector<8x64xf32>, vector<64x128xf32>, vector<8x128xf32> -> vector<8x128xf32>
    %c0_9 = arith.constant 0 : index
    %c0_10 = arith.constant 0 : index
    %12 = vector.load %arg5[%c0_9, %c0_10] : memref<1x128xf32, #tpu.memory_space<vmem>>, vector<1x128xf32>
    %13 = vector.broadcast %12 : vector<1x128xf32> to vector<8x128xf32>
    %14 = arith.addf %11, %13 : vector<8x128xf32>
    %15 = vector.extract_strided_slice %14 {offsets = [0, 0], sizes = [8, 10], strides = [1, 1]} : vector<8x128xf32> to vector<8x10xf32>
    %16 = vector.extract_strided_slice %14 {offsets = [0, 10], sizes = [8, 10], strides = [1, 1]} : vector<8x128xf32> to vector<8x10xf32>
    %cst_11 = arith.constant 5.000000e-01 : f32
    %17 = vector.broadcast %cst_11 : f32 to vector<8x10xf32>
    %18 = arith.mulf %17, %16 : vector<8x10xf32>
    %19 = math.exp %18 : vector<8x10xf32>
    %20 = arith.mulf %2, %19 : vector<8x10xf32>
    %21 = arith.addf %15, %20 : vector<8x10xf32>
    %c0_12 = arith.constant 0 : index
    %c0_13 = arith.constant 0 : index
    %22 = vector.load %arg6[%c0_12, %c0_13] : memref<10x64xf32, #tpu.memory_space<vmem>>, vector<10x64xf32>
    %cst_14 = arith.constant dense<0.000000e+00> : vector<8x64xf32>
    %23 = tpu.matmul %21, %22, %cst_14 {dimension_numbers = #tpu.dot_dimension_numbers<[1], [0], [0], [1], [0, 0, 1, 1], [], []>} : vector<8x10xf32>, vector<10x64xf32>, vector<8x64xf32> -> vector<8x64xf32>
    %c0_15 = arith.constant 0 : index
    %c0_16 = arith.constant 0 : index
    %24 = vector.load %arg7[%c0_15, %c0_16] : memref<4x64xf32, #tpu.memory_space<vmem>>, vector<4x64xf32>
    %cst_17 = arith.constant dense<0.000000e+00> : vector<8x64xf32>
    %25 = tpu.matmul %1, %24, %cst_17 {dimension_numbers = #tpu.dot_dimension_numbers<[1], [0], [0], [1], [0, 0, 1, 1], [], []>} : vector<8x4xf32>, vector<4x64xf32>, vector<8x64xf32> -> vector<8x64xf32>
    %26 = arith.addf %23, %25 : vector<8x64xf32>
    %c0_18 = arith.constant 0 : index
    %c0_19 = arith.constant 0 : index
    %27 = vector.load %arg8[%c0_18, %c0_19] : memref<1x64xf32, #tpu.memory_space<vmem>>, vector<1x64xf32>
    %28 = vector.broadcast %27 : vector<1x64xf32> to vector<8x64xf32>
    %29 = arith.addf %26, %28 : vector<8x64xf32>
    %cst_20 = arith.constant 0.000000e+00 : f32
    %30 = vector.broadcast %cst_20 : f32 to vector<8x64xf32>
    %31 = arith.maximumf %29, %30 : vector<8x64xf32>
    %c0_21 = arith.constant 0 : index
    %c0_22 = arith.constant 0 : index
    %32 = vector.load %arg9[%c0_21, %c0_22] : memref<64x128xf32, #tpu.memory_space<vmem>>, vector<64x128xf32>
    %cst_23 = arith.constant dense<0.000000e+00> : vector<8x128xf32>
    %33 = tpu.matmul %31, %32, %cst_23 {dimension_numbers = #tpu.dot_dimension_numbers<[1], [0], [0], [1], [0, 0, 1, 1], [], []>} : vector<8x64xf32>, vector<64x128xf32>, vector<8x128xf32> -> vector<8x128xf32>
    %c0_24 = arith.constant 0 : index
    %c0_25 = arith.constant 0 : index
    %34 = vector.load %arg10[%c0_24, %c0_25] : memref<1x128xf32, #tpu.memory_space<vmem>>, vector<1x128xf32>
    %35 = vector.broadcast %34 : vector<1x128xf32> to vector<8x128xf32>
    %36 = arith.addf %33, %35 : vector<8x128xf32>
    %c0_26 = arith.constant 0 : index
    %c0_27 = arith.constant 0 : index
    %37 = vector.load %arg11[%c0_26, %c0_27] : memref<8x128xf32, #tpu.memory_space<vmem>>, vector<8x128xf32>
    tpu.vector_store %arg11[%c0_26, %c0_27], %36 {strides = array<i32>} : memref<8x128xf32, #tpu.memory_space<vmem>>, vector<8x128xf32>,
    %c0_28 = arith.constant 0 : index
    %c0_29 = arith.constant 0 : index
    %38 = vector.load %arg12[%c0_28, %c0_29] : memref<8x128xf32, #tpu.memory_space<vmem>>, vector<8x128xf32>
    tpu.vector_store %arg12[%c0_28, %c0_29], %14 {strides = array<i32>} : memref<8x128xf32, #tpu.memory_space<vmem>>, vector<8x128xf32>,
    return
  }
  func.func @transform_0(%arg0: i32) -> (i32, i32) {
    %c0_i32 = arith.constant 0 : i32
    %c0_i32_0 = arith.constant 0 : i32
    return %arg0, %c0_i32 : i32, i32
  }
  func.func @transform_1(%arg0: i32) -> (i32, i32) {
    %c0_i32 = arith.constant 0 : i32
    %c0_i32_0 = arith.constant 0 : i32
    %c0_i32_1 = arith.constant 0 : i32
    return %c0_i32, %c0_i32_0 : i32, i32
  }
  func.func @transform_2(%arg0: i32) -> (i32, i32) {
    %c0_i32 = arith.constant 0 : i32
    %c0_i32_0 = arith.constant 0 : i32
    %c0_i32_1 = arith.constant 0 : i32
    return %c0_i32, %c0_i32_0 : i32, i32
  }
  func.func @transform_3(%arg0: i32) -> (i32, i32) {
    %c0_i32 = arith.constant 0 : i32
    %c0_i32_0 = arith.constant 0 : i32
    %c0_i32_1 = arith.constant 0 : i32
    return %c0_i32, %c0_i32_0 : i32, i32
  }
  func.func @transform_4(%arg0: i32) -> (i32, i32) {
    %c0_i32 = arith.constant 0 : i32
    %c0_i32_0 = arith.constant 0 : i32
    %c0_i32_1 = arith.constant 0 : i32
    return %c0_i32, %c0_i32_0 : i32, i32
  }
  func.func @transform_5(%arg0: i32) -> (i32, i32) {
    %c0_i32 = arith.constant 0 : i32
    %c0_i32_0 = arith.constant 0 : i32
    %c0_i32_1 = arith.constant 0 : i32
    return %c0_i32, %c0_i32_0 : i32, i32
  }
  func.func @transform_6(%arg0: i32) -> (i32, i32) {
    %c0_i32 = arith.constant 0 : i32
    %c0_i32_0 = arith.constant 0 : i32
    %c0_i32_1 = arith.constant 0 : i32
    return %c0_i32, %c0_i32_0 : i32, i32
  }
  func.func @transform_7(%arg0: i32) -> (i32, i32) {
    %c0_i32 = arith.constant 0 : i32
    %c0_i32_0 = arith.constant 0 : i32
    %c0_i32_1 = arith.constant 0 : i32
    return %c0_i32, %c0_i32_0 : i32, i32
  }
  func.func @transform_8(%arg0: i32) -> (i32, i32) {
    %c0_i32 = arith.constant 0 : i32
    %c0_i32_0 = arith.constant 0 : i32
    %c0_i32_1 = arith.constant 0 : i32
    return %c0_i32, %c0_i32_0 : i32, i32
  }
  func.func @transform_9(%arg0: i32) -> (i32, i32) {
    %c0_i32 = arith.constant 0 : i32
    %c0_i32_0 = arith.constant 0 : i32
    %c0_i32_1 = arith.constant 0 : i32
    return %c0_i32, %c0_i32_0 : i32, i32
  }
  func.func @transform_10(%arg0: i32) -> (i32, i32) {
    %c0_i32 = arith.constant 0 : i32
    %c0_i32_0 = arith.constant 0 : i32
    return %arg0, %c0_i32 : i32, i32
  }
  func.func @transform_11(%arg0: i32) -> (i32, i32) {
    %c0_i32 = arith.constant 0 : i32
    %c0_i32_0 = arith.constant 0 : i32
    return %arg0, %c0_i32 : i32, i32
  }
}

module attributes {stable_mosaic.version = 11 : i64} {
  func.func @_cvae_kernel(%arg0: i32, %arg1: memref<8x30xf32, #tpu.memory_space<vmem>>, %arg2: memref<30x64xf32, #tpu.memory_space<vmem>>, %arg3: memref<1x64xf32, #tpu.memory_space<vmem>>, %arg4: memref<64x128xf32, #tpu.memory_space<vmem>>, %arg5: memref<1x128xf32, #tpu.memory_space<vmem>>, %arg6: memref<10x64xf32, #tpu.memory_space<vmem>>, %arg7: memref<4x64xf32, #tpu.memory_space<vmem>>, %arg8: memref<1x64xf32, #tpu.memory_space<vmem>>, %arg9: memref<64x128xf32, #tpu.memory_space<vmem>>, %arg10: memref<1x128xf32, #tpu.memory_space<vmem>>, %arg11: memref<8x128xf32, #tpu.memory_space<vmem>>, %arg12: memref<8x128xf32, #tpu.memory_space<vmem>>) attributes {dimension_semantics = [#tpu.dimension_semantics<parallel>], iteration_bounds = array<i64: 1>, scalar_prefetch = 0 : i64, scratch_operands = 0 : i64, tpu.core_type = #tpu.core_type<tc>, window_params = [{transform_indices = @transform_0, window_bounds = array<i64: 8, 30>}, {pipeline_mode = #tpu.pipeline_mode<synchronous>, transform_indices = @transform_1, window_bounds = array<i64: 30, 64>}, {pipeline_mode = #tpu.pipeline_mode<synchronous>, transform_indices = @transform_2, window_bounds = array<i64: 1, 64>}, {pipeline_mode = #tpu.pipeline_mode<synchronous>, transform_indices = @transform_3, window_bounds = array<i64: 64, 128>}, {pipeline_mode = #tpu.pipeline_mode<synchronous>, transform_indices = @transform_4, window_bounds = array<i64: 1, 128>}, {pipeline_mode = #tpu.pipeline_mode<synchronous>, transform_indices = @transform_5, window_bounds = array<i64: 10, 64>}, {pipeline_mode = #tpu.pipeline_mode<synchronous>, transform_indices = @transform_6, window_bounds = array<i64: 4, 64>}, {pipeline_mode = #tpu.pipeline_mode<synchronous>, transform_indices = @transform_7, window_bounds = array<i64: 1, 64>}, {pipeline_mode = #tpu.pipeline_mode<synchronous>, transform_indices = @transform_8, window_bounds = array<i64: 64, 128>}, {pipeline_mode = #tpu.pipeline_mode<synchronous>, transform_indices = @transform_9, window_bounds = array<i64: 1, 128>}, {transform_indices = @transform_10, window_bounds = array<i64: 8, 128>}, {transform_indices = @transform_11, window_bounds = array<i64: 8, 128>}]} {
    %c0 = arith.constant 0 : index
    %c0_0 = arith.constant 0 : index
    %0 = vector.load %arg1[%c0, %c0_0] : memref<8x30xf32, #tpu.memory_space<vmem>>, vector<8x30xf32>
    %1 = vector.extract_strided_slice %0 {offsets = [0, 0], sizes = [8, 4], strides = [1, 1]} : vector<8x30xf32> to vector<8x4xf32>
    %2 = vector.extract_strided_slice %0 {offsets = [0, 4], sizes = [8, 10], strides = [1, 1]} : vector<8x30xf32> to vector<8x10xf32>
    %c0_1 = arith.constant 0 : index
    %c0_2 = arith.constant 0 : index
    %3 = vector.load %arg2[%c0_1, %c0_2] : memref<30x64xf32, #tpu.memory_space<vmem>>, vector<30x64xf32>
    %cst = arith.constant dense<0.000000e+00> : vector<8x64xf32>
    %4 = tpu.matmul %0, %3, %cst {dimension_numbers = #tpu.dot_dimension_numbers<[1], [0], [0], [1], [0, 0, 1, 1], [], []>} : vector<8x30xf32>, vector<30x64xf32>, vector<8x64xf32> -> vector<8x64xf32>
    %c0_3 = arith.constant 0 : index
    %c0_4 = arith.constant 0 : index
    %5 = vector.load %arg3[%c0_3, %c0_4] : memref<1x64xf32, #tpu.memory_space<vmem>>, vector<1x64xf32>
    %6 = vector.broadcast %5 : vector<1x64xf32> to vector<8x64xf32>
    %7 = arith.addf %4, %6 : vector<8x64xf32>
    %cst_5 = arith.constant 0.000000e+00 : f32
    %8 = vector.broadcast %cst_5 : f32 to vector<8x64xf32>
    %9 = arith.maximumf %7, %8 : vector<8x64xf32>
    %c0_6 = arith.constant 0 : index
    %c0_7 = arith.constant 0 : index
    %10 = vector.load %arg4[%c0_6, %c0_7] : memref<64x128xf32, #tpu.memory_space<vmem>>, vector<64x128xf32>
    %cst_8 = arith.constant dense<0.000000e+00> : vector<8x128xf32>
    %11 = tpu.matmul %9, %10, %cst_8 {dimension_numbers = #tpu.dot_dimension_numbers<[1], [0], [0], [1], [0, 0, 1, 1], [], []>} : vector<8x64xf32>, vector<64x128xf32>, vector<8x128xf32> -> vector<8x128xf32>
    %c0_9 = arith.constant 0 : index
    %c0_10 = arith.constant 0 : index
    %12 = vector.load %arg5[%c0_9, %c0_10] : memref<1x128xf32, #tpu.memory_space<vmem>>, vector<1x128xf32>
    %13 = vector.broadcast %12 : vector<1x128xf32> to vector<8x128xf32>
    %14 = arith.addf %11, %13 : vector<8x128xf32>
    %15 = vector.extract_strided_slice %14 {offsets = [0, 0], sizes = [8, 10], strides = [1, 1]} : vector<8x128xf32> to vector<8x10xf32>
    %16 = vector.extract_strided_slice %14 {offsets = [0, 10], sizes = [8, 10], strides = [1, 1]} : vector<8x128xf32> to vector<8x10xf32>
    %cst_11 = arith.constant 5.000000e-01 : f32
    %17 = vector.broadcast %cst_11 : f32 to vector<8x10xf32>
    %18 = arith.mulf %17, %16 : vector<8x10xf32>
    %19 = math.exp %18 : vector<8x10xf32>
    %20 = arith.mulf %2, %19 : vector<8x10xf32>
    %21 = arith.addf %15, %20 : vector<8x10xf32>
    %c0_12 = arith.constant 0 : index
    %c0_13 = arith.constant 0 : index
    %22 = vector.load %arg6[%c0_12, %c0_13] : memref<10x64xf32, #tpu.memory_space<vmem>>, vector<10x64xf32>
    %cst_14 = arith.constant dense<0.000000e+00> : vector<8x64xf32>
    %23 = tpu.matmul %21, %22, %cst_14 {dimension_numbers = #tpu.dot_dimension_numbers<[1], [0], [0], [1], [0, 0, 1, 1], [], []>} : vector<8x10xf32>, vector<10x64xf32>, vector<8x64xf32> -> vector<8x64xf32>
    %c0_15 = arith.constant 0 : index
    %c0_16 = arith.constant 0 : index
    %24 = vector.load %arg7[%c0_15, %c0_16] : memref<4x64xf32, #tpu.memory_space<vmem>>, vector<4x64xf32>
    %cst_17 = arith.constant dense<0.000000e+00> : vector<8x64xf32>
    %25 = tpu.matmul %1, %24, %cst_17 {dimension_numbers = #tpu.dot_dimension_numbers<[1], [0], [0], [1], [0, 0, 1, 1], [], []>} : vector<8x4xf32>, vector<4x64xf32>, vector<8x64xf32> -> vector<8x64xf32>
    %26 = arith.addf %23, %25 : vector<8x64xf32>
    %c0_18 = arith.constant 0 : index
    %c0_19 = arith.constant 0 : index
    %27 = vector.load %arg8[%c0_18, %c0_19] : memref<1x64xf32, #tpu.memory_space<vmem>>, vector<1x64xf32>
    %28 = vector.broadcast %27 : vector<1x64xf32> to vector<8x64xf32>
    %29 = arith.addf %26, %28 : vector<8x64xf32>
    %cst_20 = arith.constant 0.000000e+00 : f32
    %30 = vector.broadcast %cst_20 : f32 to vector<8x64xf32>
    %31 = arith.maximumf %29, %30 : vector<8x64xf32>
    %c0_21 = arith.constant 0 : index
    %c0_22 = arith.constant 0 : index
    %32 = vector.load %arg9[%c0_21, %c0_22] : memref<64x128xf32, #tpu.memory_space<vmem>>, vector<64x128xf32>
    %cst_23 = arith.constant dense<0.000000e+00> : vector<8x128xf32>
    %33 = tpu.matmul %31, %32, %cst_23 {dimension_numbers = #tpu.dot_dimension_numbers<[1], [0], [0], [1], [0, 0, 1, 1], [], []>} : vector<8x64xf32>, vector<64x128xf32>, vector<8x128xf32> -> vector<8x128xf32>
    %c0_24 = arith.constant 0 : index
    %c0_25 = arith.constant 0 : index
    %34 = vector.load %arg10[%c0_24, %c0_25] : memref<1x128xf32, #tpu.memory_space<vmem>>, vector<1x128xf32>
    %35 = vector.broadcast %34 : vector<1x128xf32> to vector<8x128xf32>
    %36 = arith.addf %33, %35 : vector<8x128xf32>
    %c0_26 = arith.constant 0 : index
    %c0_27 = arith.constant 0 : index
    %37 = vector.load %arg11[%c0_26, %c0_27] : memref<8x128xf32, #tpu.memory_space<vmem>>, vector<8x128xf32>
    tpu.vector_store %arg11[%c0_26, %c0_27], %36 {strides = array<i32>} : memref<8x128xf32, #tpu.memory_space<vmem>>, vector<8x128xf32>,
    %c0_28 = arith.constant 0 : index
    %c0_29 = arith.constant 0 : index
    %38 = vector.load %arg12[%c0_28, %c0_29] : memref<8x128xf32, #tpu.memory_space<vmem>>, vector<8x128xf32>
    tpu.vector_store %arg12[%c0_28, %c0_29], %14 {strides = array<i32>} : memref<8x128xf32, #tpu.memory_space<vmem>>, vector<8x128xf32>,
    return
  }
  func.func @transform_0(%arg0: i32) -> (i32, i32) {
    %c0_i32 = arith.constant 0 : i32
    %c0_i32_0 = arith.constant 0 : i32
    return %arg0, %c0_i32 : i32, i32
  }
  func.func @transform_1(%arg0: i32) -> (i32, i32) {
    %c0_i32 = arith.constant 0 : i32
    %c0_i32_0 = arith.constant 0 : i32
    %c0_i32_1 = arith.constant 0 : i32
    return %c0_i32, %c0_i32_0 : i32, i32
  }
  func.func @transform_2(%arg0: i32) -> (i32, i32) {
    %c0_i32 = arith.constant 0 : i32
    %c0_i32_0 = arith.constant 0 : i32
    %c0_i32_1 = arith.constant 0 : i32
    return %c0_i32, %c0_i32_0 : i32, i32
  }
  func.func @transform_3(%arg0: i32) -> (i32, i32) {
    %c0_i32 = arith.constant 0 : i32
    %c0_i32_0 = arith.constant 0 : i32
    %c0_i32_1 = arith.constant 0 : i32
    return %c0_i32, %c0_i32_0 : i32, i32
  }
  func.func @transform_4(%arg0: i32) -> (i32, i32) {
    %c0_i32 = arith.constant 0 : i32
    %c0_i32_0 = arith.constant 0 : i32
    %c0_i32_1 = arith.constant 0 : i32
    return %c0_i32, %c0_i32_0 : i32, i32
  }
  func.func @transform_5(%arg0: i32) -> (i32, i32) {
    %c0_i32 = arith.constant 0 : i32
    %c0_i32_0 = arith.constant 0 : i32
    %c0_i32_1 = arith.constant 0 : i32
    return %c0_i32, %c0_i32_0 : i32, i32
  }
  func.func @transform_6(%arg0: i32) -> (i32, i32) {
    %c0_i32 = arith.constant 0 : i32
    %c0_i32_0 = arith.constant 0 : i32
    %c0_i32_1 = arith.constant 0 : i32
    return %c0_i32, %c0_i32_0 : i32, i32
  }
  func.func @transform_7(%arg0: i32) -> (i32, i32) {
    %c0_i32 = arith.constant 0 : i32
    %c0_i32_0 = arith.constant 0 : i32
    %c0_i32_1 = arith.constant 0 : i32
    return %c0_i32, %c0_i32_0 : i32, i32
  }
  func.func @transform_8(%arg0: i32) -> (i32, i32) {
    %c0_i32 = arith.constant 0 : i32
    %c0_i32_0 = arith.constant 0 : i32
    %c0_i32_1 = arith.constant 0 : i32
    return %c0_i32, %c0_i32_0 : i32, i32
  }
  func.func @transform_9(%arg0: i32) -> (i32, i32) {
    %c0_i32 = arith.constant 0 : i32
    %c0_i32_0 = arith.constant 0 : i32
    %c0_i32_1 = arith.constant 0 : i32
    return %c0_i32, %c0_i32_0 : i32, i32
  }
  func.func @transform_10(%arg0: i32) -> (i32, i32) {
    %c0_i32 = arith.constant 0 : i32
    %c0_i32_0 = arith.constant 0 : i32
    return %arg0, %c0_i32 : i32, i32
  }
  func.func @transform_11(%arg0: i32) -> (i32, i32) {
    %c0_i32 = arith.constant 0 : i32
    %c0_i32_0 = arith.constant 0 : i32
    return %arg0, %c0_i32 : i32, i32
  }
}

</mosaic_0001>

<llo_original>
// kernel: tpu_custom_call.1
$region0: #{tpu_custom_call.1}
  #allocation0 [shape = 'u32[]', space=smem, size = 0x4, offset = 0x4, fixed_abs, tag = 'smem constant byte address 0x4 - core index']
  #allocation1 [shape = 'u32[144,128]{1,0:T(1,128)}', space=vmem, size = 0x12000, scoped, tag = 'internal scratch']
  %s0 = inlined_call_operand.hbm [shape: f32[8,30], index: 0, kind: input, shape index: {}]
  %s1 = inlined_call_operand.hbm [shape: f32[30,64], index: 1, kind: input, shape index: {}]
  %s2 = inlined_call_operand.vmem [shape: f32[1,64], index: 2, kind: input, shape index: {}]
  %s3 = inlined_call_operand.hbm [shape: f32[64,128], index: 3, kind: input, shape index: {}]
  %s4 = inlined_call_operand.vmem [shape: f32[1,128], index: 4, kind: input, shape index: {}]
  %s5 = inlined_call_operand.vmem [shape: f32[10,64], index: 5, kind: input, shape index: {}]
  %s6 = inlined_call_operand.vmem [shape: f32[4,64], index: 6, kind: input, shape index: {}]
  %s7 = inlined_call_operand.vmem [shape: f32[1,64], index: 7, kind: input, shape index: {}]
  %s8 = inlined_call_operand.hbm [shape: f32[64,128], index: 8, kind: input, shape index: {}]
  %s9 = inlined_call_operand.vmem [shape: f32[1,128], index: 9, kind: input, shape index: {}]
  %s10 = inlined_call_operand.hbm [shape: f32[8,128], index: 10, kind: output, shape index: {0}]
  %s11 = inlined_call_operand.hbm [shape: f32[8,128], index: 11, kind: output, shape index: {1}]
  %12 = xla_tuple %s10, %s11
  %s13 = sld [smem:[#allocation0]]
  $region74: #{tpu_custom_call.1} parent=0
    _
  %s15 = ssub.s32 1, %s13
  %s16 = scalar_select 0, %s15, %s13
  $region1: #{tpu_custom_call.1} parent=0
    #allocation2 [shape = 'u8[4096]{0}', space=vmem, size = 0x1000, scoped, tag = 'input window, operand 0, single buffered']
    #allocation3 [shape = 's32[1]{0}', space=sflag, size = 0x4, scoped, tag = 'scoped memory for tpu_custom_call.1']
    #allocation4 [shape = 's32[1]{0}', space=sflag, size = 0x4, scoped, tag = 'scoped memory for tpu_custom_call.1']
    #allocation5 [shape = 'u8[16384]{0}', space=vmem, size = 0x4000, scoped, tag = 'input window, operand 1, single buffered']
    #allocation6 [shape = 's32[1]{0}', space=sflag, size = 0x4, scoped, tag = 'scoped memory for tpu_custom_call.1']
    #allocation7 [shape = 'u8[32768]{0}', space=vmem, size = 0x8000, scoped, tag = 'input window, operand 3, single buffered']
    #allocation8 [shape = 'u8[32768]{0}', space=vmem, size = 0x8000, scoped, tag = 'input window, operand 8, single buffered']
    #allocation9 [shape = 's32[1]{0}', space=sflag, size = 0x4, scoped, tag = 'scoped memory for tpu_custom_call.1']
    #allocation10 [shape = 'u8[4096]{0}', space=vmem, size = 0x1000, scoped, tag = 'output window, operand 0, single buffered']
    #allocation11 [shape = 'u8[4096]{0}', space=vmem, size = 0x1000, scoped, tag = 'output window, operand 1, single buffered']
    #allocation12 [shape = 's32[1]{0}', space=sflag, size = 0x4, scoped, tag = 'scoped memory for tpu_custom_call.1']
    %17 = vsyncpa [#allocation3], 0
    %18 = vsyncpa [#allocation6], 0
    %19 = vsyncpa [#allocation9], 0
    %20 = vsyncpa [#allocation4], 0
    %21 = vsyncpa [#allocation12], 0
    // Predicated region
    $region2: #{tpu_custom_call.1} parent=1 // pred_check
      _
    $region3: #{tpu_custom_call.1} parent=1 // pred_check_branch
      %23 = sbr.rel (0) target = $region5
    $region4: #{tpu_custom_call.1} parent=1 // pred_region
      %s25 = ssub.s32 128, 128
      %26 = vsyncadd [#allocation3], %s25
      %s28 = sshll.u32 [#allocation2], 4
      %s29 = int_to_ptr.vmem [resolvable:$true] %s28
      %31 = dma.hbm_to_vmem [thread:$0]  %s0, 128, %s29, [#allocation3]
    $region5: #{tpu_custom_call.1} parent=1 // pred_fallthru
      _
    // Predicated region
    $region6: #{tpu_custom_call.1} parent=1 // pred_check
      _
    $region7: #{tpu_custom_call.1} parent=1 // pred_check_branch
      %33 = sbr.rel (0) target = $region9
    $region8: #{tpu_custom_call.1} parent=1 // pred_region
      %s35 = ssub.s32 512, 512
      %36 = vsyncadd [#allocation6], %s35
      %s37 = sshll.u32 [#allocation5], 4
      %s38 = int_to_ptr.vmem [resolvable:$true] %s37
      %43 = dma.hbm_to_vmem [thread:$0]  %s1, 512, %s38, [#allocation6], 128, 128, 8
    $region9: #{tpu_custom_call.1} parent=1 // pred_fallthru
      _
    // Predicated region
    $region10: #{tpu_custom_call.1} parent=1 // pred_check
      _
    $region11: #{tpu_custom_call.1} parent=1 // pred_check_branch
      %45 = sbr.rel (0) target = $region13
    $region12: #{tpu_custom_call.1} parent=1 // pred_region
      _
    $region13: #{tpu_custom_call.1} parent=1 // pred_fallthru
      _
    // Predicated region
    $region14: #{tpu_custom_call.1} parent=1 // pred_check
      _
    $region15: #{tpu_custom_call.1} parent=1 // pred_check_branch
      %47 = sbr.rel (0) target = $region17
    $region16: #{tpu_custom_call.1} parent=1 // pred_region
      %s49 = ssub.s32 1024, 1024
      %50 = vsyncadd [#allocation6], %s49
      %s51 = sshll.u32 [#allocation7], 4
      %s52 = int_to_ptr.vmem [resolvable:$true] %s51
      %57 = dma.hbm_to_vmem [thread:$0]  %s3, 1024, %s52, [#allocation6], 128, 128, 8
    $region17: #{tpu_custom_call.1} parent=1 // pred_fallthru
      _
    // Predicated region
    $region18: #{tpu_custom_call.1} parent=1 // pred_check
      _
    $region19: #{tpu_custom_call.1} parent=1 // pred_check_branch
      %59 = sbr.rel (0) target = $region21
    $region20: #{tpu_custom_call.1} parent=1 // pred_region
      _
    $region21: #{tpu_custom_call.1} parent=1 // pred_fallthru
      _
    // Predicated region
    $region22: #{tpu_custom_call.1} parent=1 // pred_check
      _
    $region23: #{tpu_custom_call.1} parent=1 // pred_check_branch
      %61 = sbr.rel (0) target = $region25
    $region24: #{tpu_custom_call.1} parent=1 // pred_region
      _
    $region25: #{tpu_custom_call.1} parent=1 // pred_fallthru
      _
    // Predicated region
    $region26: #{tpu_custom_call.1} parent=1 // pred_check
      _
    $region27: #{tpu_custom_call.1} parent=1 // pred_check_branch
      %63 = sbr.rel (0) target = $region29
    $region28: #{tpu_custom_call.1} parent=1 // pred_region
      _
    $region29: #{tpu_custom_call.1} parent=1 // pred_fallthru
      _
    // Predicated region
    $region30: #{tpu_custom_call.1} parent=1 // pred_check
      _
    $region31: #{tpu_custom_call.1} parent=1 // pred_check_branch
      %65 = sbr.rel (0) target = $region33
    $region32: #{tpu_custom_call.1} parent=1 // pred_region
      _
    $region33: #{tpu_custom_call.1} parent=1 // pred_fallthru
      _
    // Predicated region
    $region34: #{tpu_custom_call.1} parent=1 // pred_check
      _
    $region35: #{tpu_custom_call.1} parent=1 // pred_check_branch
      %67 = sbr.rel (0) target = $region37
    $region36: #{tpu_custom_call.1} parent=1 // pred_region
      %s69 = ssub.s32 1024, 1024
      %70 = vsyncadd [#allocation9], %s69
      %s71 = sshll.u32 [#allocation8], 4
      %s72 = int_to_ptr.vmem [resolvable:$true] %s71
      %77 = dma.hbm_to_vmem [thread:$0]  %s8, 1024, %s72, [#allocation9], 128, 128, 8
    $region37: #{tpu_custom_call.1} parent=1 // pred_fallthru
      _
    // Predicated region
    $region38: #{tpu_custom_call.1} parent=1 // pred_check
      _
    $region39: #{tpu_custom_call.1} parent=1 // pred_check_branch
      %79 = sbr.rel (0) target = $region41
    $region40: #{tpu_custom_call.1} parent=1 // pred_region
      _
    $region41: #{tpu_custom_call.1} parent=1 // pred_fallthru
      _
    // Predicated region
    $region42: #{tpu_custom_call.1} parent=1 // pred_check
      _
    $region43: #{tpu_custom_call.1} parent=1 // pred_check_branch
      %81 = sbr.rel (0) target = $region45
    $region44: #{tpu_custom_call.1} parent=1 // pred_region
      %82 = dma.done [#allocation3], 128
    $region45: #{tpu_custom_call.1} parent=1 // pred_fallthru
      _
    // Predicated region
    $region46: #{tpu_custom_call.1} parent=1 // pred_check
      _
    $region47: #{tpu_custom_call.1} parent=1 // pred_check_branch
      %84 = sbr.rel (0) target = $region49
    $region48: #{tpu_custom_call.1} parent=1 // pred_region
      %85 = dma.done [#allocation6], 512
    $region49: #{tpu_custom_call.1} parent=1 // pred_fallthru
      _
    // Predicated region
    $region50: #{tpu_custom_call.1} parent=1 // pred_check
      _
    $region51: #{tpu_custom_call.1} parent=1 // pred_check_branch
      %87 = sbr.rel (0) target = $region53
    $region52: #{tpu_custom_call.1} parent=1 // pred_region
      %88 = dma.done [#allocation6], 1024
    $region53: #{tpu_custom_call.1} parent=1 // pred_fallthru
      _
    // Predicated region
    $region54: #{tpu_custom_call.1} parent=1 // pred_check
      _
    $region55: #{tpu_custom_call.1} parent=1 // pred_check_branch
      %90 = sbr.rel (0) target = $region57
    $region56: #{tpu_custom_call.1} parent=1 // pred_region
      %91 = dma.done [#allocation9], 1024
    $region57: #{tpu_custom_call.1} parent=1 // pred_fallthru
      _
    %v92 = vld [vmem:[#allocation2] sm:$0xff]
    %v93 = vld [vmem:[#allocation5] sm:$0xff]
    %v94 = vld [vmem:[#allocation5 + $0x8] sm:$0xff]
    %v95 = vld [vmem:[#allocation5 + $0x10] sm:$0xff]
    %v96 = vld [vmem:[#allocation5 + $0x18] sm:$0x3f]
    %v97 = vld [vmem:[%s2] sm:$0x1]
    %v99 = vlaneseq
    %v100 = vshrl.u32 %v99, 7
    %v101 = vsub.s32 0, %v100
    %v102 = vrot.slane %v97, %v101
    %vm104 = vcmask 244736
    %v106 = vsel %vm104, %v92, 0
    %vm108 = vcmask 1045504
    %v110 = vsel %vm108, %v96, 0
    %112 = vmatprep.subr.mxu0 0.0
    %113 = vmatpush1.msra.mxu0 %v93
    %114 = vmatprep.subr.mxu0 0.0
    %115 = vmatpush1.msra.mxu0 %v94
    %116 = vmatprep.subr.mxu0 0.0
    %117 = vmatpush1.msra.mxu0 %v95
    %118 = vmatprep.subr.mxu0 0.0
    %119 = vmatpush1.msra.mxu0 %v110
    %120 = vmatprep.subr.mxu0 0.0
    %121 = vmatpush1.msra.mxu0 0.0
    %122 = vmatprep.subr.mxu0 0.0
    %123 = vmatpush1.msra.mxu0 0.0
    %124 = vmatprep.subr.mxu0 0.0
    %125 = vmatpush1.msra.mxu0 0.0
    %126 = vmatprep.subr.mxu0 0.0
    %127 = vmatpush1.msra.mxu0 0.0
    %128 = vmatprep.subr.mxu0 0.0
    %129 = vmatpush1.msra.mxu0 0.0
    %130 = vmatprep.subr.mxu0 0.0
    %131 = vmatpush1.msra.mxu0 0.0
    %132 = vmatprep.subr.mxu0 0.0
    %133 = vmatpush1.msra.mxu0 0.0
    %134 = vmatprep.subr.mxu0 0.0
    %135 = vmatpush1.msra.mxu0 0.0
    %136 = vmatprep.subr.mxu0 0.0
    %137 = vmatpush1.msra.mxu0 0.0
    %138 = vmatprep.subr.mxu0 0.0
    %139 = vmatpush1.msra.mxu0 0.0
    %140 = vmatprep.subr.mxu0 0.0
    %141 = vmatpush1.msra.mxu0 0.0
    %142 = vmatprep.subr.mxu0 0.0
    %143 = vmatpush1.msra.mxu0 0.0
    %144 = vmatprep.subr.mxu0 0.0
    %145 = vmatpush1.msra.mxu0 0.0
    %146 = vmatprep.subr.mxu0 0.0
    %147 = vmatpush1.msra.mxu0 0.0
    %148 = vmatprep.subr.mxu0 0.0
    %149 = vmatpush1.msra.mxu0 0.0
    %150 = vmatprep.subr.mxu0 0.0
    %151 = vmatpush1.msra.mxu0 0.0
    %152 = vmatprep.subr.mxu0 0.0
    %153 = vmatpush1.msra.mxu0 0.0
    %154 = vmatprep.subr.mxu0 0.0
    %155 = vmatpush1.msra.mxu0 0.0
    %156 = vmatprep.subr.mxu0 0.0
    %157 = vmatpush1.msra.mxu0 0.0
    %158 = vmatprep.subr.mxu0 0.0
    %159 = vmatpush1.msra.mxu0 0.0
    %160 = vmatprep.subr.mxu0 0.0
    %161 = vmatpush1.msra.mxu0 0.0
    %162 = vmatprep.subr.mxu0 0.0
    %163 = vmatpush1.msra.mxu0 0.0
    %164 = vmatprep.subr.mxu0 0.0
    %165 = vmatpush1.msra.mxu0 0.0
    %166 = vmatprep.subr.mxu0 0.0
    %167 = vmatpush1.msra.mxu0 0.0
    %168 = vmatprep.subr.mxu0 0.0
    %169 = vmatpush1.msra.mxu0 0.0
    %170 = vmatprep.subr.mxu0 0.0
    %171 = vmatpush1.msra.mxu0 0.0
    %172 = vmatprep.subr.mxu0 0.0
    %173 = vmatpush1.msra.mxu0 0.0
    %174 = vmatprep.subr.mxu0 0.0
    %175 = vmatpush1.msra.mxu0 0.0
    %176 = vmatprep.mubr.f32.mxu0 0.0
    %177 = vmatmul.mubr.f32.gmra.mrb[0].mxu0 %v106
    %v178 = vpop.f32.mrb[0].mxu0
    %v179 = vadd.f32 %v102, %v178
    %v180 = vpop.f32.mrb[0].mxu0
    %181 = vdwg.mxu0
    %v182 = vmax.f32 %v179, 0.0
    %v183 = vld [vmem:[#allocation7] sm:$0xff]
    %v184 = vld [vmem:[#allocation7 + $0x8] sm:$0xff]
    %v185 = vld [vmem:[#allocation7 + $0x10] sm:$0xff]
    %v186 = vld [vmem:[#allocation7 + $0x18] sm:$0xff]
    %v187 = vld [vmem:[#allocation7 + $0x20] sm:$0xff]
    %v188 = vld [vmem:[#allocation7 + $0x28] sm:$0xff]
    %v189 = vld [vmem:[#allocation7 + $0x30] sm:$0xff]
    %v190 = vld [vmem:[#allocation7 + $0x38] sm:$0xff]
    %v191 = vld [vmem:[%s4] sm:$0x1]
    %v193 = vlaneseq
    %v194 = vshrl.u32 %v193, 7
    %v195 = vsub.s32 0, %v194
    %v196 = vrot.slane %v191, %v195
    %vm198 = vcmask 523264
    %v200 = vsel %vm198, %v182, 0
    %202 = vmatprep.subr.mxu0 0.0
    %203 = vmatpush1.msra.mxu0 %v183
    %204 = vmatprep.subr.mxu0 0.0
    %205 = vmatpush1.msra.mxu0 %v184
    %206 = vmatprep.subr.mxu0 0.0
    %207 = vmatpush1.msra.mxu0 %v185
    %208 = vmatprep.subr.mxu0 0.0
    %209 = vmatpush1.msra.mxu0 %v186
    %210 = vmatprep.subr.mxu0 0.0
    %211 = vmatpush1.msra.mxu0 %v187
    %212 = vmatprep.subr.mxu0 0.0
    %213 = vmatpush1.msra.mxu0 %v188
    %214 = vmatprep.subr.mxu0 0.0
    %215 = vmatpush1.msra.mxu0 %v189
    %216 = vmatprep.subr.mxu0 0.0
    %217 = vmatpush1.msra.mxu0 %v190
    %218 = vmatprep.subr.mxu0 0.0
    %219 = vmatpush1.msra.mxu0 0.0
    %220 = vmatprep.subr.mxu0 0.0
    %221 = vmatpush1.msra.mxu0 0.0
    %222 = vmatprep.subr.mxu0 0.0
    %223 = vmatpush1.msra.mxu0 0.0
    %224 = vmatprep.subr.mxu0 0.0
    %225 = vmatpush1.msra.mxu0 0.0
    %226 = vmatprep.subr.mxu0 0.0
    %227 = vmatpush1.msra.mxu0 0.0
    %228 = vmatprep.subr.mxu0 0.0
    %229 = vmatpush1.msra.mxu0 0.0
    %230 = vmatprep.subr.mxu0 0.0
    %231 = vmatpush1.msra.mxu0 0.0
    %232 = vmatprep.subr.mxu0 0.0
    %233 = vmatpush1.msra.mxu0 0.0
    %234 = vmatprep.subr.mxu0 0.0
    %235 = vmatpush1.msra.mxu0 0.0
    %236 = vmatprep.subr.mxu0 0.0
    %237 = vmatpush1.msra.mxu0 0.0
    %238 = vmatprep.subr.mxu0 0.0
    %239 = vmatpush1.msra.mxu0 0.0
    %240 = vmatprep.subr.mxu0 0.0
    %241 = vmatpush1.msra.mxu0 0.0
    %242 = vmatprep.subr.mxu0 0.0
    %243 = vmatpush1.msra.mxu0 0.0
    %244 = vmatprep.subr.mxu0 0.0
    %245 = vmatpush1.msra.mxu0 0.0
    %246 = vmatprep.subr.mxu0 0.0
    %247 = vmatpush1.msra.mxu0 0.0
    %248 = vmatprep.subr.mxu0 0.0
    %249 = vmatpush1.msra.mxu0 0.0
    %250 = vmatprep.subr.mxu0 0.0
    %251 = vmatpush1.msra.mxu0 0.0
    %252 = vmatprep.subr.mxu0 0.0
    %253 = vmatpush1.msra.mxu0 0.0
    %254 = vmatprep.subr.mxu0 0.0
    %255 = vmatpush1.msra.mxu0 0.0
    %256 = vmatprep.subr.mxu0 0.0
    %257 = vmatpush1.msra.mxu0 0.0
    %258 = vmatprep.subr.mxu0 0.0
    %259 = vmatpush1.msra.mxu0 0.0
    %260 = vmatprep.subr.mxu0 0.0
    %261 = vmatpush1.msra.mxu0 0.0
    %262 = vmatprep.subr.mxu0 0.0
    %263 = vmatpush1.msra.mxu0 0.0
    %264 = vmatprep.subr.mxu0 0.0
    %265 = vmatpush1.msra.mxu0 0.0
    %266 = vmatprep.mubr.f32.mxu0 0.0
    %267 = vmatmul.mubr.f32.gmra.mrb[0].mxu0 %v200
    %v268 = vpop.f32.mrb[0].mxu0
    %v269 = vadd.f32 %v196, %v268
    %v270 = vpop.f32.mrb[0].mxu0
    %271 = vdwg.mxu0
    %v272 = vmul.f32 %v269, 0.5
    %v273 = vmul.f32 %v272, 1.442695
    %v274 = vpow.pop %v273
    %276 = vrot.lane.b32.xlu0 %v274, 122
    %v277 = vpop.permute.xlu0 %276
    %v279 = vmul.f32 %v92, %v277
    %281 = vrot.lane.b32.xlu0 %v279, 124
    %v282 = vpop.permute.xlu0 %281
    %v284 = vadd.f32 %v269, %v282
    %v285 = vld [vmem:[%s5] sm:$0xff]
    %v286 = vld [vmem:[%s5 + $0x8] sm:$0x3]
    %v287 = vld [vmem:[%s6] sm:$0xf]
    %vm288 = vcmask 31744
    %v289 = vsel %vm288, %v92, 0
    %vm291 = vcmask 1043456
    %v293 = vsel %vm291, %v287, 0
    %295 = vmatprep.subr.mxu0 0.0
    %296 = vmatpush1.msra.mxu0 %v293
    %297 = vmatprep.subr.mxu0 0.0
    %298 = vmatpush1.msra.mxu0 0.0
    %299 = vmatprep.subr.mxu0 0.0
    %300 = vmatpush1.msra.mxu0 0.0
    %301 = vmatprep.subr.mxu0 0.0
    %302 = vmatpush1.msra.mxu0 0.0
    %303 = vmatprep.subr.mxu0 0.0
    %304 = vmatpush1.msra.mxu0 0.0
    %305 = vmatprep.subr.mxu0 0.0
    %306 = vmatpush1.msra.mxu0 0.0
    %307 = vmatprep.subr.mxu0 0.0
    %308 = vmatpush1.msra.mxu0 0.0
    %309 = vmatprep.subr.mxu0 0.0
    %310 = vmatpush1.msra.mxu0 0.0
    %311 = vmatprep.subr.mxu0 0.0
    %312 = vmatpush1.msra.mxu0 0.0
    %313 = vmatprep.subr.mxu0 0.0
    %314 = vmatpush1.msra.mxu0 0.0
    %315 = vmatprep.subr.mxu0 0.0
    %316 = vmatpush1.msra.mxu0 0.0
    %317 = vmatprep.subr.mxu0 0.0
    %318 = vmatpush1.msra.mxu0 0.0
    %319 = vmatprep.subr.mxu0 0.0
    %320 = vmatpush1.msra.mxu0 0.0
    %321 = vmatprep.subr.mxu0 0.0
    %322 = vmatpush1.msra.mxu0 0.0
    %323 = vmatprep.subr.mxu0 0.0
    %324 = vmatpush1.msra.mxu0 0.0
    %325 = vmatprep.subr.mxu0 0.0
    %326 = vmatpush1.msra.mxu0 0.0
    %327 = vmatprep.subr.mxu0 0.0
    %328 = vmatpush1.msra.mxu0 0.0
    %329 = vmatprep.subr.mxu0 0.0
    %330 = vmatpush1.msra.mxu0 0.0
    %331 = vmatprep.subr.mxu0 0.0
    %332 = vmatpush1.msra.mxu0 0.0
    %333 = vmatprep.subr.mxu0 0.0
    %334 = vmatpush1.msra.mxu0 0.0
    %335 = vmatprep.subr.mxu0 0.0
    %336 = vmatpush1.msra.mxu0 0.0
    %337 = vmatprep.subr.mxu0 0.0
    %338 = vmatpush1.msra.mxu0 0.0
    %339 = vmatprep.subr.mxu0 0.0
    %340 = vmatpush1.msra.mxu0 0.0
    %341 = vmatprep.subr.mxu0 0.0
    %342 = vmatpush1.msra.mxu0 0.0
    %343 = vmatprep.subr.mxu0 0.0
    %344 = vmatpush1.msra.mxu0 0.0
    %345 = vmatprep.subr.mxu0 0.0
    %346 = vmatpush1.msra.mxu0 0.0
    %347 = vmatprep.subr.mxu0 0.0
    %348 = vmatpush1.msra.mxu0 0.0
    %349 = vmatprep.subr.mxu0 0.0
    %350 = vmatpush1.msra.mxu0 0.0
    %351 = vmatprep.subr.mxu0 0.0
    %352 = vmatpush1.msra.mxu0 0.0
    %353 = vmatprep.subr.mxu0 0.0
    %354 = vmatpush1.msra.mxu0 0.0
    %355 = vmatprep.subr.mxu0 0.0
    %356 = vmatpush1.msra.mxu0 0.0
    %357 = vmatprep.subr.mxu0 0.0
    %358 = vmatpush1.msra.mxu0 0.0
    %359 = vmatprep.mubr.f32.mxu0 0.0
    %360 = vmatmul.mubr.f32.gmra.mrb[0].mxu0 %v289
    %v361 = vpop.f32.mrb[0].mxu0
    %v362 = vadd.f32 0.0, %v361
    %v363 = vpop.f32.mrb[0].mxu0
    %364 = vdwg.mxu0
    %vm365 = vcmask 80896
    %v367 = vsel %vm365, %v284, 0
    %vm369 = vcmask 1041408
    %v371 = vsel %vm369, %v286, 0
    %373 = vmatprep.subr.mxu0 0.0
    %374 = vmatpush1.msra.mxu0 %v285
    %375 = vmatprep.subr.mxu0 0.0
    %376 = vmatpush1.msra.mxu0 %v371
    %377 = vmatprep.subr.mxu0 0.0
    %378 = vmatpush1.msra.mxu0 0.0
    %379 = vmatprep.subr.mxu0 0.0
    %380 = vmatpush1.msra.mxu0 0.0
    %381 = vmatprep.subr.mxu0 0.0
    %382 = vmatpush1.msra.mxu0 0.0
    %383 = vmatprep.subr.mxu0 0.0
    %384 = vmatpush1.msra.mxu0 0.0
    %385 = vmatprep.subr.mxu0 0.0
    %386 = vmatpush1.msra.mxu0 0.0
    %387 = vmatprep.subr.mxu0 0.0
    %388 = vmatpush1.msra.mxu0 0.0
    %389 = vmatprep.subr.mxu0 0.0
    %390 = vmatpush1.msra.mxu0 0.0
    %391 = vmatprep.subr.mxu0 0.0
    %392 = vmatpush1.msra.mxu0 0.0
    %393 = vmatprep.subr.mxu0 0.0
    %394 = vmatpush1.msra.mxu0 0.0
    %395 = vmatprep.subr.mxu0 0.0
    %396 = vmatpush1.msra.mxu0 0.0
    %397 = vmatprep.subr.mxu0 0.0
    %398 = vmatpush1.msra.mxu0 0.0
    %399 = vmatprep.subr.mxu0 0.0
    %400 = vmatpush1.msra.mxu0 0.0
    %401 = vmatprep.subr.mxu0 0.0
    %402 = vmatpush1.msra.mxu0 0.0
    %403 = vmatprep.subr.mxu0 0.0
    %404 = vmatpush1.msra.mxu0 0.0
    %405 = vmatprep.subr.mxu0 0.0
    %406 = vmatpush1.msra.mxu0 0.0
    %407 = vmatprep.subr.mxu0 0.0
    %408 = vmatpush1.msra.mxu0 0.0
    %409 = vmatprep.subr.mxu0 0.0
    %410 = vmatpush1.msra.mxu0 0.0
    %411 = vmatprep.subr.mxu0 0.0
    %412 = vmatpush1.msra.mxu0 0.0
    %413 = vmatprep.subr.mxu0 0.0
    %414 = vmatpush1.msra.mxu0 0.0
    %415 = vmatprep.subr.mxu0 0.0
    %416 = vmatpush1.msra.mxu0 0.0
    %417 = vmatprep.subr.mxu0 0.0
    %418 = vmatpush1.msra.mxu0 0.0
    %419 = vmatprep.subr.mxu0 0.0
    %420 = vmatpush1.msra.mxu0 0.0
    %421 = vmatprep.subr.mxu0 0.0
    %422 = vmatpush1.msra.mxu0 0.0
    %423 = vmatprep.subr.mxu0 0.0
    %424 = vmatpush1.msra.mxu0 0.0
    %425 = vmatprep.subr.mxu0 0.0
    %426 = vmatpush1.msra.mxu0 0.0
    %427 = vmatprep.subr.mxu0 0.0
    %428 = vmatpush1.msra.mxu0 0.0
    %429 = vmatprep.subr.mxu0 0.0
    %430 = vmatpush1.msra.mxu0 0.0
    %431 = vmatprep.subr.mxu0 0.0
    %432 = vmatpush1.msra.mxu0 0.0
    %433 = vmatprep.subr.mxu0 0.0
    %434 = vmatpush1.msra.mxu0 0.0
    %435 = vmatprep.subr.mxu0 0.0
    %436 = vmatpush1.msra.mxu0 0.0
    %437 = vmatprep.mubr.f32.mxu0 0.0
    %438 = vmatmul.mubr.f32.gmra.mrb[0].mxu0 %v367
    %v439 = vpop.f32.mrb[0].mxu0
    %v440 = vadd.f32 %v362, %v439
    %v441 = vpop.f32.mrb[0].mxu0
    %442 = vdwg.mxu0
    %v443 = vld [vmem:[%s7] sm:$0x1]
    %v445 = vlaneseq
    %v446 = vshrl.u32 %v445, 7
    %v447 = vsub.s32 0, %v446
    %v448 = vrot.slane %v443, %v447
    %v450 = vadd.f32 %v440, %v448
    %v451 = vmax.f32 %v450, 0.0
    %v452 = vld [vmem:[#allocation8] sm:$0xff]
    %v453 = vld [vmem:[#allocation8 + $0x8] sm:$0xff]
    %v454 = vld [vmem:[#allocation8 + $0x10] sm:$0xff]
    %v455 = vld [vmem:[#allocation8 + $0x18] sm:$0xff]
    %v456 = vld [vmem:[#allocation8 + $0x20] sm:$0xff]
    %v457 = vld [vmem:[#allocation8 + $0x28] sm:$0xff]
    %v458 = vld [vmem:[#allocation8 + $0x30] sm:$0xff]
    %v459 = vld [vmem:[#allocation8 + $0x38] sm:$0xff]
    %v460 = vld [vmem:[%s9] sm:$0x1]
    %v462 = vlaneseq
    %v463 = vshrl.u32 %v462, 7
    %v464 = vsub.s32 0, %v463
    %v465 = vrot.slane %v460, %v464
    %v468 = vsel %vm198, %v451, 0
    %470 = vmatprep.subr.mxu0 0.0
    %471 = vmatpush1.msra.mxu0 %v452
    %472 = vmatprep.subr.mxu0 0.0
    %473 = vmatpush1.msra.mxu0 %v453
    %474 = vmatprep.subr.mxu0 0.0
    %475 = vmatpush1.msra.mxu0 %v454
    %476 = vmatprep.subr.mxu0 0.0
    %477 = vmatpush1.msra.mxu0 %v455
    %478 = vmatprep.subr.mxu0 0.0
    %479 = vmatpush1.msra.mxu0 %v456
    %480 = vmatprep.subr.mxu0 0.0
    %481 = vmatpush1.msra.mxu0 %v457
    %482 = vmatprep.subr.mxu0 0.0
    %483 = vmatpush1.msra.mxu0 %v458
    %484 = vmatprep.subr.mxu0 0.0
    %485 = vmatpush1.msra.mxu0 %v459
    %486 = vmatprep.subr.mxu0 0.0
    %487 = vmatpush1.msra.mxu0 0.0
    %488 = vmatprep.subr.mxu0 0.0
    %489 = vmatpush1.msra.mxu0 0.0
    %490 = vmatprep.subr.mxu0 0.0
    %491 = vmatpush1.msra.mxu0 0.0
    %492 = vmatprep.subr.mxu0 0.0
    %493 = vmatpush1.msra.mxu0 0.0
    %494 = vmatprep.subr.mxu0 0.0
    %495 = vmatpush1.msra.mxu0 0.0
    %496 = vmatprep.subr.mxu0 0.0
    %497 = vmatpush1.msra.mxu0 0.0
    %498 = vmatprep.subr.mxu0 0.0
    %499 = vmatpush1.msra.mxu0 0.0
    %500 = vmatprep.subr.mxu0 0.0
    %501 = vmatpush1.msra.mxu0 0.0
    %502 = vmatprep.subr.mxu0 0.0
    %503 = vmatpush1.msra.mxu0 0.0
    %504 = vmatprep.subr.mxu0 0.0
    %505 = vmatpush1.msra.mxu0 0.0
    %506 = vmatprep.subr.mxu0 0.0
    %507 = vmatpush1.msra.mxu0 0.0
    %508 = vmatprep.subr.mxu0 0.0
    %509 = vmatpush1.msra.mxu0 0.0
    %510 = vmatprep.subr.mxu0 0.0
    %511 = vmatpush1.msra.mxu0 0.0
    %512 = vmatprep.subr.mxu0 0.0
    %513 = vmatpush1.msra.mxu0 0.0
    %514 = vmatprep.subr.mxu0 0.0
    %515 = vmatpush1.msra.mxu0 0.0
    %516 = vmatprep.subr.mxu0 0.0
    %517 = vmatpush1.msra.mxu0 0.0
    %518 = vmatprep.subr.mxu0 0.0
    %519 = vmatpush1.msra.mxu0 0.0
    %520 = vmatprep.subr.mxu0 0.0
    %521 = vmatpush1.msra.mxu0 0.0
    %522 = vmatprep.subr.mxu0 0.0
    %523 = vmatpush1.msra.mxu0 0.0
    %524 = vmatprep.subr.mxu0 0.0
    %525 = vmatpush1.msra.mxu0 0.0
    %526 = vmatprep.subr.mxu0 0.0
    %527 = vmatpush1.msra.mxu0 0.0
    %528 = vmatprep.subr.mxu0 0.0
    %529 = vmatpush1.msra.mxu0 0.0
    %530 = vmatprep.subr.mxu0 0.0
    %531 = vmatpush1.msra.mxu0 0.0
    %532 = vmatprep.subr.mxu0 0.0
    %533 = vmatpush1.msra.mxu0 0.0
    %534 = vmatprep.mubr.f32.mxu0 0.0
    %535 = vmatmul.mubr.f32.gmra.mrb[0].mxu0 %v468
    %v536 = vpop.f32.mrb[0].mxu0
    %v537 = vadd.f32 %v465, %v536
    %v538 = vpop.f32.mrb[0].mxu0
    %539 = vdwg.mxu0
    %540 = vst [vmem:[#allocation10] sm:$0xff] %v537
    %541 = vst [vmem:[#allocation11] sm:$0xff] %v269
    // Predicated region
    $region58: #{tpu_custom_call.1} parent=1 // pred_check
      _
    $region59: #{tpu_custom_call.1} parent=1 // pred_check_branch
      %543 = sbr.rel (0) target = $region61
    $region60: #{tpu_custom_call.1} parent=1 // pred_region
      %s545 = ssub.s32 128, 128
      %546 = vsyncadd [#allocation4], %s545
      %s548 = sshll.u32 [#allocation10], 4
      %s549 = int_to_ptr.vmem [resolvable:$true] %s548
      %551 = dma.vmem_to_hbm [thread:$0]  %s549, 128, %s10, [#allocation4]
    $region61: #{tpu_custom_call.1} parent=1 // pred_fallthru
      _
    // Predicated region
    $region62: #{tpu_custom_call.1} parent=1 // pred_check
      _
    $region63: #{tpu_custom_call.1} parent=1 // pred_check_branch
      %553 = sbr.rel (0) target = $region65
    $region64: #{tpu_custom_call.1} parent=1 // pred_region
      %s555 = ssub.s32 128, 128
      %556 = vsyncadd [#allocation12], %s555
      %s558 = sshll.u32 [#allocation11], 4
      %s559 = int_to_ptr.vmem [resolvable:$true] %s558
      %561 = dma.vmem_to_hbm [thread:$0]  %s559, 128, %s11, [#allocation12]
    $region65: #{tpu_custom_call.1} parent=1 // pred_fallthru
      _
    // Predicated region
    $region66: #{tpu_custom_call.1} parent=1 // pred_check
      _
    $region67: #{tpu_custom_call.1} parent=1 // pred_check_branch
      %563 = sbr.rel (0) target = $region69
    $region68: #{tpu_custom_call.1} parent=1 // pred_region
      %564 = dma.done [#allocation4], 128
    $region69: #{tpu_custom_call.1} parent=1 // pred_fallthru
      _
    // Predicated region
    $region70: #{tpu_custom_call.1} parent=1 // pred_check
      _
    $region71: #{tpu_custom_call.1} parent=1 // pred_check_branch
      %566 = sbr.rel (0) target = $region73
    $region72: #{tpu_custom_call.1} parent=1 // pred_region
      %567 = dma.done [#allocation12], 128
    $region73: #{tpu_custom_call.1} parent=1 // pred_fallthru
      _
    %568 = vsyncpa [#allocation3], 1
    %569 = vsyncpa [#allocation6], 1
    %570 = vsyncpa [#allocation9], 1
    %571 = vsyncpa [#allocation4], 1
    %572 = vsyncpa [#allocation12], 1

// kernel: tpu_custom_call.1
$region0: #{tpu_custom_call.1}
  #allocation0 [shape = 'u32[]', space=smem, size = 0x4, offset = 0x4, fixed_abs, tag = 'smem constant byte address 0x4 - core index']
  #allocation1 [shape = 'u32[144,128]{1,0:T(1,128)}', space=vmem, size = 0x12000, scoped, tag = 'internal scratch']
  %s0 = inlined_call_operand.hbm [shape: f32[8,30], index: 0, kind: input, shape index: {}]
  %s1 = inlined_call_operand.hbm [shape: f32[30,64], index: 1, kind: input, shape index: {}]
  %s2 = inlined_call_operand.vmem [shape: f32[1,64], index: 2, kind: input, shape index: {}]
  %s3 = inlined_call_operand.hbm [shape: f32[64,128], index: 3, kind: input, shape index: {}]
  %s4 = inlined_call_operand.vmem [shape: f32[1,128], index: 4, kind: input, shape index: {}]
  %s5 = inlined_call_operand.vmem [shape: f32[10,64], index: 5, kind: input, shape index: {}]
  %s6 = inlined_call_operand.vmem [shape: f32[4,64], index: 6, kind: input, shape index: {}]
  %s7 = inlined_call_operand.vmem [shape: f32[1,64], index: 7, kind: input, shape index: {}]
  %s8 = inlined_call_operand.hbm [shape: f32[64,128], index: 8, kind: input, shape index: {}]
  %s9 = inlined_call_operand.vmem [shape: f32[1,128], index: 9, kind: input, shape index: {}]
  %s10 = inlined_call_operand.hbm [shape: f32[8,128], index: 10, kind: output, shape index: {0}]
  %s11 = inlined_call_operand.hbm [shape: f32[8,128], index: 11, kind: output, shape index: {1}]
  %12 = xla_tuple %s10, %s11
  %s13 = sld [smem:[#allocation0]]
  $region74: #{tpu_custom_call.1} parent=0
    _
  %s15 = ssub.s32 1, %s13
  %s16 = scalar_select 0, %s15, %s13
  $region1: #{tpu_custom_call.1} parent=0
    #allocation2 [shape = 'u8[4096]{0}', space=vmem, size = 0x1000, scoped, tag = 'input window, operand 0, single buffered']
    #allocation3 [shape = 's32[1]{0}', space=sflag, size = 0x4, scoped, tag = 'scoped memory for tpu_custom_call.1']
    #allocation4 [shape = 's32[1]{0}', space=sflag, size = 0x4, scoped, tag = 'scoped memory for tpu_custom_call.1']
    #allocation5 [shape = 'u8[16384]{0}', space=vmem, size = 0x4000, scoped, tag = 'input window, operand 1, single buffered']
    #allocation6 [shape = 's32[1]{0}', space=sflag, size = 0x4, scoped, tag = 'scoped memory for tpu_custom_call.1']
    #allocation7 [shape = 'u8[32768]{0}', space=vmem, size = 0x8000, scoped, tag = 'input window, operand 3, single buffered']
    #allocation8 [shape = 'u8[32768]{0}', space=vmem, size = 0x8000, scoped, tag = 'input window, operand 8, single buffered']
    #allocation9 [shape = 's32[1]{0}', space=sflag, size = 0x4, scoped, tag = 'scoped memory for tpu_custom_call.1']
    #allocation10 [shape = 'u8[4096]{0}', space=vmem, size = 0x1000, scoped, tag = 'output window, operand 0, single buffered']
    #allocation11 [shape = 'u8[4096]{0}', space=vmem, size = 0x1000, scoped, tag = 'output window, operand 1, single buffered']
    #allocation12 [shape = 's32[1]{0}', space=sflag, size = 0x4, scoped, tag = 'scoped memory for tpu_custom_call.1']
    %17 = vsyncpa [#allocation3], 0
    %18 = vsyncpa [#allocation6], 0
    %19 = vsyncpa [#allocation9], 0
    %20 = vsyncpa [#allocation4], 0
    %21 = vsyncpa [#allocation12], 0
    // Predicated region
    $region2: #{tpu_custom_call.1} parent=1 // pred_check
      _
    $region3: #{tpu_custom_call.1} parent=1 // pred_check_branch
      %23 = sbr.rel (0) target = $region5
    $region4: #{tpu_custom_call.1} parent=1 // pred_region
      %s25 = ssub.s32 128, 128
      %26 = vsyncadd [#allocation3], %s25
      %s28 = sshll.u32 [#allocation2], 4
      %s29 = int_to_ptr.vmem [resolvable:$true] %s28
      %31 = dma.hbm_to_vmem [thread:$0]  %s0, 128, %s29, [#allocation3]
    $region5: #{tpu_custom_call.1} parent=1 // pred_fallthru
      _
    // Predicated region
    $region6: #{tpu_custom_call.1} parent=1 // pred_check
      _
    $region7: #{tpu_custom_call.1} parent=1 // pred_check_branch
      %33 = sbr.rel (0) target = $region9
    $region8: #{tpu_custom_call.1} parent=1 // pred_region
      %s35 = ssub.s32 512, 512
      %36 = vsyncadd [#allocation6], %s35
      %s37 = sshll.u32 [#allocation5], 4
      %s38 = int_to_ptr.vmem [resolvable:$true] %s37
      %43 = dma.hbm_to_vmem [thread:$0]  %s1, 512, %s38, [#allocation6], 128, 128, 8
    $region9: #{tpu_custom_call.1} parent=1 // pred_fallthru
      _
    // Predicated region
    $region10: #{tpu_custom_call.1} parent=1 // pred_check
      _
    $region11: #{tpu_custom_call.1} parent=1 // pred_check_branch
      %45 = sbr.rel (0) target = $region13
    $region12: #{tpu_custom_call.1} parent=1 // pred_region
      _
    $region13: #{tpu_custom_call.1} parent=1 // pred_fallthru
      _
    // Predicated region
    $region14: #{tpu_custom_call.1} parent=1 // pred_check
      _
    $region15: #{tpu_custom_call.1} parent=1 // pred_check_branch
      %47 = sbr.rel (0) target = $region17
    $region16: #{tpu_custom_call.1} parent=1 // pred_region
      %s49 = ssub.s32 1024, 1024
      %50 = vsyncadd [#allocation6], %s49
      %s51 = sshll.u32 [#allocation7], 4
      %s52 = int_to_ptr.vmem [resolvable:$true] %s51
      %57 = dma.hbm_to_vmem [thread:$0]  %s3, 1024, %s52, [#allocation6], 128, 128, 8
    $region17: #{tpu_custom_call.1} parent=1 // pred_fallthru
      _
    // Predicated region
    $region18: #{tpu_custom_call.1} parent=1 // pred_check
      _
    $region19: #{tpu_custom_call.1} parent=1 // pred_check_branch
      %59 = sbr.rel (0) target = $region21
    $region20: #{tpu_custom_call.1} parent=1 // pred_region
      _
    $region21: #{tpu_custom_call.1} parent=1 // pred_fallthru
      _
    // Predicated region
    $region22: #{tpu_custom_call.1} parent=1 // pred_check
      _
    $region23: #{tpu_custom_call.1} parent=1 // pred_check_branch
      %61 = sbr.rel (0) target = $region25
    $region24: #{tpu_custom_call.1} parent=1 // pred_region
      _
    $region25: #{tpu_custom_call.1} parent=1 // pred_fallthru
      _
    // Predicated region
    $region26: #{tpu_custom_call.1} parent=1 // pred_check
      _
    $region27: #{tpu_custom_call.1} parent=1 // pred_check_branch
      %63 = sbr.rel (0) target = $region29
    $region28: #{tpu_custom_call.1} parent=1 // pred_region
      _
    $region29: #{tpu_custom_call.1} parent=1 // pred_fallthru
      _
    // Predicated region
    $region30: #{tpu_custom_call.1} parent=1 // pred_check
      _
    $region31: #{tpu_custom_call.1} parent=1 // pred_check_branch
      %65 = sbr.rel (0) target = $region33
    $region32: #{tpu_custom_call.1} parent=1 // pred_region
      _
    $region33: #{tpu_custom_call.1} parent=1 // pred_fallthru
      _
    // Predicated region
    $region34: #{tpu_custom_call.1} parent=1 // pred_check
      _
    $region35: #{tpu_custom_call.1} parent=1 // pred_check_branch
      %67 = sbr.rel (0) target = $region37
    $region36: #{tpu_custom_call.1} parent=1 // pred_region
      %s69 = ssub.s32 1024, 1024
      %70 = vsyncadd [#allocation9], %s69
      %s71 = sshll.u32 [#allocation8], 4
      %s72 = int_to_ptr.vmem [resolvable:$true] %s71
      %77 = dma.hbm_to_vmem [thread:$0]  %s8, 1024, %s72, [#allocation9], 128, 128, 8
    $region37: #{tpu_custom_call.1} parent=1 // pred_fallthru
      _
    // Predicated region
    $region38: #{tpu_custom_call.1} parent=1 // pred_check
      _
    $region39: #{tpu_custom_call.1} parent=1 // pred_check_branch
      %79 = sbr.rel (0) target = $region41
    $region40: #{tpu_custom_call.1} parent=1 // pred_region
      _
    $region41: #{tpu_custom_call.1} parent=1 // pred_fallthru
      _
    // Predicated region
    $region42: #{tpu_custom_call.1} parent=1 // pred_check
      _
    $region43: #{tpu_custom_call.1} parent=1 // pred_check_branch
      %81 = sbr.rel (0) target = $region45
    $region44: #{tpu_custom_call.1} parent=1 // pred_region
      %82 = dma.done [#allocation3], 128
    $region45: #{tpu_custom_call.1} parent=1 // pred_fallthru
      _
    // Predicated region
    $region46: #{tpu_custom_call.1} parent=1 // pred_check
      _
    $region47: #{tpu_custom_call.1} parent=1 // pred_check_branch
      %84 = sbr.rel (0) target = $region49
    $region48: #{tpu_custom_call.1} parent=1 // pred_region
      %85 = dma.done [#allocation6], 512
    $region49: #{tpu_custom_call.1} parent=1 // pred_fallthru
      _
    // Predicated region
    $region50: #{tpu_custom_call.1} parent=1 // pred_check
      _
    $region51: #{tpu_custom_call.1} parent=1 // pred_check_branch
      %87 = sbr.rel (0) target = $region53
    $region52: #{tpu_custom_call.1} parent=1 // pred_region
      %88 = dma.done [#allocation6], 1024
    $region53: #{tpu_custom_call.1} parent=1 // pred_fallthru
      _
    // Predicated region
    $region54: #{tpu_custom_call.1} parent=1 // pred_check
      _
    $region55: #{tpu_custom_call.1} parent=1 // pred_check_branch
      %90 = sbr.rel (0) target = $region57
    $region56: #{tpu_custom_call.1} parent=1 // pred_region
      %91 = dma.done [#allocation9], 1024
    $region57: #{tpu_custom_call.1} parent=1 // pred_fallthru
      _
    %v92 = vld [vmem:[#allocation2] sm:$0xff]
    %v93 = vld [vmem:[#allocation5] sm:$0xff]
    %v94 = vld [vmem:[#allocation5 + $0x8] sm:$0xff]
    %v95 = vld [vmem:[#allocation5 + $0x10] sm:$0xff]
    %v96 = vld [vmem:[#allocation5 + $0x18] sm:$0x3f]
    %v97 = vld [vmem:[%s2] sm:$0x1]
    %v99 = vlaneseq
    %v100 = vshrl.u32 %v99, 7
    %v101 = vsub.s32 0, %v100
    %v102 = vrot.slane %v97, %v101
    %vm104 = vcmask 244736
    %v106 = vsel %vm104, %v92, 0
    %vm108 = vcmask 1045504
    %v110 = vsel %vm108, %v96, 0
    %112 = vmatprep.subr.mxu0 0.0
    %113 = vmatpush1.msra.mxu0 %v93
    %114 = vmatprep.subr.mxu0 0.0
    %115 = vmatpush1.msra.mxu0 %v94
    %116 = vmatprep.subr.mxu0 0.0
    %117 = vmatpush1.msra.mxu0 %v95
    %118 = vmatprep.subr.mxu0 0.0
    %119 = vmatpush1.msra.mxu0 %v110
    %120 = vmatprep.subr.mxu0 0.0
    %121 = vmatpush1.msra.mxu0 0.0
    %122 = vmatprep.subr.mxu0 0.0
    %123 = vmatpush1.msra.mxu0 0.0
    %124 = vmatprep.subr.mxu0 0.0
    %125 = vmatpush1.msra.mxu0 0.0
    %126 = vmatprep.subr.mxu0 0.0
    %127 = vmatpush1.msra.mxu0 0.0
    %128 = vmatprep.subr.mxu0 0.0
    %129 = vmatpush1.msra.mxu0 0.0
    %130 = vmatprep.subr.mxu0 0.0
    %131 = vmatpush1.msra.mxu0 0.0
    %132 = vmatprep.subr.mxu0 0.0
    %133 = vmatpush1.msra.mxu0 0.0
    %134 = vmatprep.subr.mxu0 0.0
    %135 = vmatpush1.msra.mxu0 0.0
    %136 = vmatprep.subr.mxu0 0.0
    %137 = vmatpush1.msra.mxu0 0.0
    %138 = vmatprep.subr.mxu0 0.0
    %139 = vmatpush1.msra.mxu0 0.0
    %140 = vmatprep.subr.mxu0 0.0
    %141 = vmatpush1.msra.mxu0 0.0
    %142 = vmatprep.subr.mxu0 0.0
    %143 = vmatpush1.msra.mxu0 0.0
    %144 = vmatprep.subr.mxu0 0.0
    %145 = vmatpush1.msra.mxu0 0.0
    %146 = vmatprep.subr.mxu0 0.0
    %147 = vmatpush1.msra.mxu0 0.0
    %148 = vmatprep.subr.mxu0 0.0
    %149 = vmatpush1.msra.mxu0 0.0
    %150 = vmatprep.subr.mxu0 0.0
    %151 = vmatpush1.msra.mxu0 0.0
    %152 = vmatprep.subr.mxu0 0.0
    %153 = vmatpush1.msra.mxu0 0.0
    %154 = vmatprep.subr.mxu0 0.0
    %155 = vmatpush1.msra.mxu0 0.0
    %156 = vmatprep.subr.mxu0 0.0
    %157 = vmatpush1.msra.mxu0 0.0
    %158 = vmatprep.subr.mxu0 0.0
    %159 = vmatpush1.msra.mxu0 0.0
    %160 = vmatprep.subr.mxu0 0.0
    %161 = vmatpush1.msra.mxu0 0.0
    %162 = vmatprep.subr.mxu0 0.0
    %163 = vmatpush1.msra.mxu0 0.0
    %164 = vmatprep.subr.mxu0 0.0
    %165 = vmatpush1.msra.mxu0 0.0
    %166 = vmatprep.subr.mxu0 0.0
    %167 = vmatpush1.msra.mxu0 0.0
    %168 = vmatprep.subr.mxu0 0.0
    %169 = vmatpush1.msra.mxu0 0.0
    %170 = vmatprep.subr.mxu0 0.0
    %171 = vmatpush1.msra.mxu0 0.0
    %172 = vmatprep.subr.mxu0 0.0
    %173 = vmatpush1.msra.mxu0 0.0
    %174 = vmatprep.subr.mxu0 0.0
    %175 = vmatpush1.msra.mxu0 0.0
    %176 = vmatprep.mubr.f32.mxu0 0.0
    %177 = vmatmul.mubr.f32.gmra.mrb[0].mxu0 %v106
    %v178 = vpop.f32.mrb[0].mxu0
    %v179 = vadd.f32 %v102, %v178
    %v180 = vpop.f32.mrb[0].mxu0
    %181 = vdwg.mxu0
    %v182 = vmax.f32 %v179, 0.0
    %v183 = vld [vmem:[#allocation7] sm:$0xff]
    %v184 = vld [vmem:[#allocation7 + $0x8] sm:$0xff]
    %v185 = vld [vmem:[#allocation7 + $0x10] sm:$0xff]
    %v186 = vld [vmem:[#allocation7 + $0x18] sm:$0xff]
    %v187 = vld [vmem:[#allocation7 + $0x20] sm:$0xff]
    %v188 = vld [vmem:[#allocation7 + $0x28] sm:$0xff]
    %v189 = vld [vmem:[#allocation7 + $0x30] sm:$0xff]
    %v190 = vld [vmem:[#allocation7 + $0x38] sm:$0xff]
    %v191 = vld [vmem:[%s4] sm:$0x1]
    %v193 = vlaneseq
    %v194 = vshrl.u32 %v193, 7
    %v195 = vsub.s32 0, %v194
    %v196 = vrot.slane %v191, %v195
    %vm198 = vcmask 523264
    %v200 = vsel %vm198, %v182, 0
    %202 = vmatprep.subr.mxu0 0.0
    %203 = vmatpush1.msra.mxu0 %v183
    %204 = vmatprep.subr.mxu0 0.0
    %205 = vmatpush1.msra.mxu0 %v184
    %206 = vmatprep.subr.mxu0 0.0
    %207 = vmatpush1.msra.mxu0 %v185
    %208 = vmatprep.subr.mxu0 0.0
    %209 = vmatpush1.msra.mxu0 %v186
    %210 = vmatprep.subr.mxu0 0.0
    %211 = vmatpush1.msra.mxu0 %v187
    %212 = vmatprep.subr.mxu0 0.0
    %213 = vmatpush1.msra.mxu0 %v188
    %214 = vmatprep.subr.mxu0 0.0
    %215 = vmatpush1.msra.mxu0 %v189
    %216 = vmatprep.subr.mxu0 0.0
    %217 = vmatpush1.msra.mxu0 %v190
    %218 = vmatprep.subr.mxu0 0.0
    %219 = vmatpush1.msra.mxu0 0.0
    %220 = vmatprep.subr.mxu0 0.0
    %221 = vmatpush1.msra.mxu0 0.0
    %222 = vmatprep.subr.mxu0 0.0
    %223 = vmatpush1.msra.mxu0 0.0
    %224 = vmatprep.subr.mxu0 0.0
    %225 = vmatpush1.msra.mxu0 0.0
    %226 = vmatprep.subr.mxu0 0.0
    %227 = vmatpush1.msra.mxu0 0.0
    %228 = vmatprep.subr.mxu0 0.0
    %229 = vmatpush1.msra.mxu0 0.0
    %230 = vmatprep.subr.mxu0 0.0
    %231 = vmatpush1.msra.mxu0 0.0
    %232 = vmatprep.subr.mxu0 0.0
    %233 = vmatpush1.msra.mxu0 0.0
    %234 = vmatprep.subr.mxu0 0.0
    %235 = vmatpush1.msra.mxu0 0.0
    %236 = vmatprep.subr.mxu0 0.0
    %237 = vmatpush1.msra.mxu0 0.0
    %238 = vmatprep.subr.mxu0 0.0
    %239 = vmatpush1.msra.mxu0 0.0
    %240 = vmatprep.subr.mxu0 0.0
    %241 = vmatpush1.msra.mxu0 0.0
    %242 = vmatprep.subr.mxu0 0.0
    %243 = vmatpush1.msra.mxu0 0.0
    %244 = vmatprep.subr.mxu0 0.0
    %245 = vmatpush1.msra.mxu0 0.0
    %246 = vmatprep.subr.mxu0 0.0
    %247 = vmatpush1.msra.mxu0 0.0
    %248 = vmatprep.subr.mxu0 0.0
    %249 = vmatpush1.msra.mxu0 0.0
    %250 = vmatprep.subr.mxu0 0.0
    %251 = vmatpush1.msra.mxu0 0.0
    %252 = vmatprep.subr.mxu0 0.0
    %253 = vmatpush1.msra.mxu0 0.0
    %254 = vmatprep.subr.mxu0 0.0
    %255 = vmatpush1.msra.mxu0 0.0
    %256 = vmatprep.subr.mxu0 0.0
    %257 = vmatpush1.msra.mxu0 0.0
    %258 = vmatprep.subr.mxu0 0.0
    %259 = vmatpush1.msra.mxu0 0.0
    %260 = vmatprep.subr.mxu0 0.0
    %261 = vmatpush1.msra.mxu0 0.0
    %262 = vmatprep.subr.mxu0 0.0
    %263 = vmatpush1.msra.mxu0 0.0
    %264 = vmatprep.subr.mxu0 0.0
    %265 = vmatpush1.msra.mxu0 0.0
    %266 = vmatprep.mubr.f32.mxu0 0.0
    %267 = vmatmul.mubr.f32.gmra.mrb[0].mxu0 %v200
    %v268 = vpop.f32.mrb[0].mxu0
    %v269 = vadd.f32 %v196, %v268
    %v270 = vpop.f32.mrb[0].mxu0
    %271 = vdwg.mxu0
    %v272 = vmul.f32 %v269, 0.5
    %v273 = vmul.f32 %v272, 1.442695
    %v274 = vpow.pop %v273
    %276 = vrot.lane.b32.xlu0 %v274, 122
    %v277 = vpop.permute.xlu0 %276
    %v279 = vmul.f32 %v92, %v277
    %281 = vrot.lane.b32.xlu0 %v279, 124
    %v282 = vpop.permute.xlu0 %281
    %v284 = vadd.f32 %v269, %v282
    %v285 = vld [vmem:[%s5] sm:$0xff]
    %v286 = vld [vmem:[%s5 + $0x8] sm:$0x3]
    %v287 = vld [vmem:[%s6] sm:$0xf]
    %vm288 = vcmask 31744
    %v289 = vsel %vm288, %v92, 0
    %vm291 = vcmask 1043456
    %v293 = vsel %vm291, %v287, 0
    %295 = vmatprep.subr.mxu0 0.0
    %296 = vmatpush1.msra.mxu0 %v293
    %297 = vmatprep.subr.mxu0 0.0
    %298 = vmatpush1.msra.mxu0 0.0
    %299 = vmatprep.subr.mxu0 0.0
    %300 = vmatpush1.msra.mxu0 0.0
    %301 = vmatprep.subr.mxu0 0.0
    %302 = vmatpush1.msra.mxu0 0.0
    %303 = vmatprep.subr.mxu0 0.0
    %304 = vmatpush1.msra.mxu0 0.0
    %305 = vmatprep.subr.mxu0 0.0
    %306 = vmatpush1.msra.mxu0 0.0
    %307 = vmatprep.subr.mxu0 0.0
    %308 = vmatpush1.msra.mxu0 0.0
    %309 = vmatprep.subr.mxu0 0.0
    %310 = vmatpush1.msra.mxu0 0.0
    %311 = vmatprep.subr.mxu0 0.0
    %312 = vmatpush1.msra.mxu0 0.0
    %313 = vmatprep.subr.mxu0 0.0
    %314 = vmatpush1.msra.mxu0 0.0
    %315 = vmatprep.subr.mxu0 0.0
    %316 = vmatpush1.msra.mxu0 0.0
    %317 = vmatprep.subr.mxu0 0.0
    %318 = vmatpush1.msra.mxu0 0.0
    %319 = vmatprep.subr.mxu0 0.0
    %320 = vmatpush1.msra.mxu0 0.0
    %321 = vmatprep.subr.mxu0 0.0
    %322 = vmatpush1.msra.mxu0 0.0
    %323 = vmatprep.subr.mxu0 0.0
    %324 = vmatpush1.msra.mxu0 0.0
    %325 = vmatprep.subr.mxu0 0.0
    %326 = vmatpush1.msra.mxu0 0.0
    %327 = vmatprep.subr.mxu0 0.0
    %328 = vmatpush1.msra.mxu0 0.0
    %329 = vmatprep.subr.mxu0 0.0
    %330 = vmatpush1.msra.mxu0 0.0
    %331 = vmatprep.subr.mxu0 0.0
    %332 = vmatpush1.msra.mxu0 0.0
    %333 = vmatprep.subr.mxu0 0.0
    %334 = vmatpush1.msra.mxu0 0.0
    %335 = vmatprep.subr.mxu0 0.0
    %336 = vmatpush1.msra.mxu0 0.0
    %337 = vmatprep.subr.mxu0 0.0
    %338 = vmatpush1.msra.mxu0 0.0
    %339 = vmatprep.subr.mxu0 0.0
    %340 = vmatpush1.msra.mxu0 0.0
    %341 = vmatprep.subr.mxu0 0.0
    %342 = vmatpush1.msra.mxu0 0.0
    %343 = vmatprep.subr.mxu0 0.0
    %344 = vmatpush1.msra.mxu0 0.0
    %345 = vmatprep.subr.mxu0 0.0
    %346 = vmatpush1.msra.mxu0 0.0
    %347 = vmatprep.subr.mxu0 0.0
    %348 = vmatpush1.msra.mxu0 0.0
    %349 = vmatprep.subr.mxu0 0.0
    %350 = vmatpush1.msra.mxu0 0.0
    %351 = vmatprep.subr.mxu0 0.0
    %352 = vmatpush1.msra.mxu0 0.0
    %353 = vmatprep.subr.mxu0 0.0
    %354 = vmatpush1.msra.mxu0 0.0
    %355 = vmatprep.subr.mxu0 0.0
    %356 = vmatpush1.msra.mxu0 0.0
    %357 = vmatprep.subr.mxu0 0.0
    %358 = vmatpush1.msra.mxu0 0.0
    %359 = vmatprep.mubr.f32.mxu0 0.0
    %360 = vmatmul.mubr.f32.gmra.mrb[0].mxu0 %v289
    %v361 = vpop.f32.mrb[0].mxu0
    %v362 = vadd.f32 0.0, %v361
    %v363 = vpop.f32.mrb[0].mxu0
    %364 = vdwg.mxu0
    %vm365 = vcmask 80896
    %v367 = vsel %vm365, %v284, 0
    %vm369 = vcmask 1041408
    %v371 = vsel %vm369, %v286, 0
    %373 = vmatprep.subr.mxu0 0.0
    %374 = vmatpush1.msra.mxu0 %v285
    %375 = vmatprep.subr.mxu0 0.0
    %376 = vmatpush1.msra.mxu0 %v371
    %377 = vmatprep.subr.mxu0 0.0
    %378 = vmatpush1.msra.mxu0 0.0
    %379 = vmatprep.subr.mxu0 0.0
    %380 = vmatpush1.msra.mxu0 0.0
    %381 = vmatprep.subr.mxu0 0.0
    %382 = vmatpush1.msra.mxu0 0.0
    %383 = vmatprep.subr.mxu0 0.0
    %384 = vmatpush1.msra.mxu0 0.0
    %385 = vmatprep.subr.mxu0 0.0
    %386 = vmatpush1.msra.mxu0 0.0
    %387 = vmatprep.subr.mxu0 0.0
    %388 = vmatpush1.msra.mxu0 0.0
    %389 = vmatprep.subr.mxu0 0.0
    %390 = vmatpush1.msra.mxu0 0.0
    %391 = vmatprep.subr.mxu0 0.0
    %392 = vmatpush1.msra.mxu0 0.0
    %393 = vmatprep.subr.mxu0 0.0
    %394 = vmatpush1.msra.mxu0 0.0
    %395 = vmatprep.subr.mxu0 0.0
    %396 = vmatpush1.msra.mxu0 0.0
    %397 = vmatprep.subr.mxu0 0.0
    %398 = vmatpush1.msra.mxu0 0.0
    %399 = vmatprep.subr.mxu0 0.0
    %400 = vmatpush1.msra.mxu0 0.0
    %401 = vmatprep.subr.mxu0 0.0
    %402 = vmatpush1.msra.mxu0 0.0
    %403 = vmatprep.subr.mxu0 0.0
    %404 = vmatpush1.msra.mxu0 0.0
    %405 = vmatprep.subr.mxu0 0.0
    %406 = vmatpush1.msra.mxu0 0.0
    %407 = vmatprep.subr.mxu0 0.0
    %408 = vmatpush1.msra.mxu0 0.0
    %409 = vmatprep.subr.mxu0 0.0
    %410 = vmatpush1.msra.mxu0 0.0
    %411 = vmatprep.subr.mxu0 0.0
    %412 = vmatpush1.msra.mxu0 0.0
    %413 = vmatprep.subr.mxu0 0.0
    %414 = vmatpush1.msra.mxu0 0.0
    %415 = vmatprep.subr.mxu0 0.0
    %416 = vmatpush1.msra.mxu0 0.0
    %417 = vmatprep.subr.mxu0 0.0
    %418 = vmatpush1.msra.mxu0 0.0
    %419 = vmatprep.subr.mxu0 0.0
    %420 = vmatpush1.msra.mxu0 0.0
    %421 = vmatprep.subr.mxu0 0.0
    %422 = vmatpush1.msra.mxu0 0.0
    %423 = vmatprep.subr.mxu0 0.0
    %424 = vmatpush1.msra.mxu0 0.0
    %425 = vmatprep.subr.mxu0 0.0
    %426 = vmatpush1.msra.mxu0 0.0
    %427 = vmatprep.subr.mxu0 0.0
    %428 = vmatpush1.msra.mxu0 0.0
    %429 = vmatprep.subr.mxu0 0.0
    %430 = vmatpush1.msra.mxu0 0.0
    %431 = vmatprep.subr.mxu0 0.0
    %432 = vmatpush1.msra.mxu0 0.0
    %433 = vmatprep.subr.mxu0 0.0
    %434 = vmatpush1.msra.mxu0 0.0
    %435 = vmatprep.subr.mxu0 0.0
    %436 = vmatpush1.msra.mxu0 0.0
    %437 = vmatprep.mubr.f32.mxu0 0.0
    %438 = vmatmul.mubr.f32.gmra.mrb[0].mxu0 %v367
    %v439 = vpop.f32.mrb[0].mxu0
    %v440 = vadd.f32 %v362, %v439
    %v441 = vpop.f32.mrb[0].mxu0
    %442 = vdwg.mxu0
    %v443 = vld [vmem:[%s7] sm:$0x1]
    %v445 = vlaneseq
    %v446 = vshrl.u32 %v445, 7
    %v447 = vsub.s32 0, %v446
    %v448 = vrot.slane %v443, %v447
    %v450 = vadd.f32 %v440, %v448
    %v451 = vmax.f32 %v450, 0.0
    %v452 = vld [vmem:[#allocation8] sm:$0xff]
    %v453 = vld [vmem:[#allocation8 + $0x8] sm:$0xff]
    %v454 = vld [vmem:[#allocation8 + $0x10] sm:$0xff]
    %v455 = vld [vmem:[#allocation8 + $0x18] sm:$0xff]
    %v456 = vld [vmem:[#allocation8 + $0x20] sm:$0xff]
    %v457 = vld [vmem:[#allocation8 + $0x28] sm:$0xff]
    %v458 = vld [vmem:[#allocation8 + $0x30] sm:$0xff]
    %v459 = vld [vmem:[#allocation8 + $0x38] sm:$0xff]
    %v460 = vld [vmem:[%s9] sm:$0x1]
    %v462 = vlaneseq
    %v463 = vshrl.u32 %v462, 7
    %v464 = vsub.s32 0, %v463
    %v465 = vrot.slane %v460, %v464
    %v468 = vsel %vm198, %v451, 0
    %470 = vmatprep.subr.mxu0 0.0
    %471 = vmatpush1.msra.mxu0 %v452
    %472 = vmatprep.subr.mxu0 0.0
    %473 = vmatpush1.msra.mxu0 %v453
    %474 = vmatprep.subr.mxu0 0.0
    %475 = vmatpush1.msra.mxu0 %v454
    %476 = vmatprep.subr.mxu0 0.0
    %477 = vmatpush1.msra.mxu0 %v455
    %478 = vmatprep.subr.mxu0 0.0
    %479 = vmatpush1.msra.mxu0 %v456
    %480 = vmatprep.subr.mxu0 0.0
    %481 = vmatpush1.msra.mxu0 %v457
    %482 = vmatprep.subr.mxu0 0.0
    %483 = vmatpush1.msra.mxu0 %v458
    %484 = vmatprep.subr.mxu0 0.0
    %485 = vmatpush1.msra.mxu0 %v459
    %486 = vmatprep.subr.mxu0 0.0
    %487 = vmatpush1.msra.mxu0 0.0
    %488 = vmatprep.subr.mxu0 0.0
    %489 = vmatpush1.msra.mxu0 0.0
    %490 = vmatprep.subr.mxu0 0.0
    %491 = vmatpush1.msra.mxu0 0.0
    %492 = vmatprep.subr.mxu0 0.0
    %493 = vmatpush1.msra.mxu0 0.0
    %494 = vmatprep.subr.mxu0 0.0
    %495 = vmatpush1.msra.mxu0 0.0
    %496 = vmatprep.subr.mxu0 0.0
    %497 = vmatpush1.msra.mxu0 0.0
    %498 = vmatprep.subr.mxu0 0.0
    %499 = vmatpush1.msra.mxu0 0.0
    %500 = vmatprep.subr.mxu0 0.0
    %501 = vmatpush1.msra.mxu0 0.0
    %502 = vmatprep.subr.mxu0 0.0
    %503 = vmatpush1.msra.mxu0 0.0
    %504 = vmatprep.subr.mxu0 0.0
    %505 = vmatpush1.msra.mxu0 0.0
    %506 = vmatprep.subr.mxu0 0.0
    %507 = vmatpush1.msra.mxu0 0.0
    %508 = vmatprep.subr.mxu0 0.0
    %509 = vmatpush1.msra.mxu0 0.0
    %510 = vmatprep.subr.mxu0 0.0
    %511 = vmatpush1.msra.mxu0 0.0
    %512 = vmatprep.subr.mxu0 0.0
    %513 = vmatpush1.msra.mxu0 0.0
    %514 = vmatprep.subr.mxu0 0.0
    %515 = vmatpush1.msra.mxu0 0.0
    %516 = vmatprep.subr.mxu0 0.0
    %517 = vmatpush1.msra.mxu0 0.0
    %518 = vmatprep.subr.mxu0 0.0
    %519 = vmatpush1.msra.mxu0 0.0
    %520 = vmatprep.subr.mxu0 0.0
    %521 = vmatpush1.msra.mxu0 0.0
    %522 = vmatprep.subr.mxu0 0.0
    %523 = vmatpush1.msra.mxu0 0.0
    %524 = vmatprep.subr.mxu0 0.0
    %525 = vmatpush1.msra.mxu0 0.0
    %526 = vmatprep.subr.mxu0 0.0
    %527 = vmatpush1.msra.mxu0 0.0
    %528 = vmatprep.subr.mxu0 0.0
    %529 = vmatpush1.msra.mxu0 0.0
    %530 = vmatprep.subr.mxu0 0.0
    %531 = vmatpush1.msra.mxu0 0.0
    %532 = vmatprep.subr.mxu0 0.0
    %533 = vmatpush1.msra.mxu0 0.0
    %534 = vmatprep.mubr.f32.mxu0 0.0
    %535 = vmatmul.mubr.f32.gmra.mrb[0].mxu0 %v468
    %v536 = vpop.f32.mrb[0].mxu0
    %v537 = vadd.f32 %v465, %v536
    %v538 = vpop.f32.mrb[0].mxu0
    %539 = vdwg.mxu0
    %540 = vst [vmem:[#allocation10] sm:$0xff] %v537
    %541 = vst [vmem:[#allocation11] sm:$0xff] %v269
    // Predicated region
    $region58: #{tpu_custom_call.1} parent=1 // pred_check
      _
    $region59: #{tpu_custom_call.1} parent=1 // pred_check_branch
      %543 = sbr.rel (0) target = $region61
    $region60: #{tpu_custom_call.1} parent=1 // pred_region
      %s545 = ssub.s32 128, 128
      %546 = vsyncadd [#allocation4], %s545
      %s548 = sshll.u32 [#allocation10], 4
      %s549 = int_to_ptr.vmem [resolvable:$true] %s548
      %551 = dma.vmem_to_hbm [thread:$0]  %s549, 128, %s10, [#allocation4]
    $region61: #{tpu_custom_call.1} parent=1 // pred_fallthru
      _
    // Predicated region
    $region62: #{tpu_custom_call.1} parent=1 // pred_check
      _
    $region63: #{tpu_custom_call.1} parent=1 // pred_check_branch
      %553 = sbr.rel (0) target = $region65
    $region64: #{tpu_custom_call.1} parent=1 // pred_region
      %s555 = ssub.s32 128, 128
      %556 = vsyncadd [#allocation12], %s555
      %s558 = sshll.u32 [#allocation11], 4
      %s559 = int_to_ptr.vmem [resolvable:$true] %s558
      %561 = dma.vmem_to_hbm [thread:$0]  %s559, 128, %s11, [#allocation12]
    $region65: #{tpu_custom_call.1} parent=1 // pred_fallthru
      _
    // Predicated region
    $region66: #{tpu_custom_call.1} parent=1 // pred_check
      _
    $region67: #{tpu_custom_call.1} parent=1 // pred_check_branch
      %563 = sbr.rel (0) target = $region69
    $region68: #{tpu_custom_call.1} parent=1 // pred_region
      %564 = dma.done [#allocation4], 128
    $region69: #{tpu_custom_call.1} parent=1 // pred_fallthru
      _
    // Predicated region
    $region70: #{tpu_custom_call.1} parent=1 // pred_check
      _
    $region71: #{tpu_custom_call.1} parent=1 // pred_check_branch
      %566 = sbr.rel (0) target = $region73
    $region72: #{tpu_custom_call.1} parent=1 // pred_region
      %567 = dma.done [#allocation12], 128
    $region73: #{tpu_custom_call.1} parent=1 // pred_fallthru
      _
    %568 = vsyncpa [#allocation3], 1
    %569 = vsyncpa [#allocation6], 1
    %570 = vsyncpa [#allocation9], 1
    %571 = vsyncpa [#allocation4], 1
    %572 = vsyncpa [#allocation12], 1

</llo_original>
